<compile_context>
chip_gen: v7x
topology: tpu7x:2x2x1
jax: 0.10.0
libtpu: 0.0.40
codegen_flags: <defaults>
</compile_context>

<pallas_src>
import jax
import jax.numpy as jnp
from jax.experimental import pallas as pl
from jax.experimental.pallas import tpu as pltpu

KERNEL_SIZES_CONTEXT = (1, 3, 5)
K_MAX = max(KERNEL_SIZES_CONTEXT)          # 5
PAD_MAX = K_MAX // 2                       # 2


def _round_up(x, m):
    return (x + m - 1) // m * m


def igcn5_kernel(x_ref, wstack_ref, bconv_ref, wd_ref, bd_ref, out_ref):
    """One batch tile: fused conv(k in {1,3,5}) + ReLU + maxpool(L) + dense.

    x_ref     : (L_pad, TB, D_pad)  bf16, zero-padded (PAD_MAX each side of L,
                                    zeros in D beyond the real feature dim)
    wstack_ref: (K_MAX, D_pad, F_pad) bf16 fused conv weights (zero-padded taps)
    bconv_ref : (1, F_pad) f32 fused conv bias
    wd_ref    : (F_pad, P_pad) f32 dense weight (transposed, zero-padded)
    bd_ref    : (1, P_pad) f32 dense bias
    out_ref   : (TB, P_pad) f32
    """
    L_pad, TB, Dp = x_ref.shape
    Fp = wstack_ref.shape[-1]
    L = L_pad - (K_MAX - 1)

    # Shifted-window conv as K_MAX wide MXU matmuls on (TB*L, D_pad) slabs.
    acc = jnp.zeros((L * TB, Fp), jnp.float32)
    for s in range(K_MAX):                                 # static unroll (5)
        xs = x_ref[pl.ds(s, L), :, :].reshape(L * TB, Dp)  # (TB*L, D_pad) bf16
        acc = acc + jnp.dot(xs, wstack_ref[s],
                            preferred_element_type=jnp.float32)

    act = jnp.maximum(acc + bconv_ref[...], 0.0)           # ReLU, f32
    pooled = jnp.max(act.reshape(L, TB, Fp), axis=0)       # maxpool over L -> (TB, Fp)

    out = jnp.dot(pooled, wd_ref[...],
                  preferred_element_type=jnp.float32) + bd_ref[...]
    out_ref[...] = out.astype(out_ref.dtype)               # lane-dense (TB, P_pad)


def igcn5_forward(x, conv_ws, conv_bs, wd, bd, *, block_b=None):
    """x: (B, L, D) f32 concatenated embeddings; returns (B, P) f32 logits."""
    B, L, D = x.shape
    P = wd.shape[0]
    C = conv_ws[0].shape[-1]
    n_k = len(KERNEL_SIZES_CONTEXT)
    F = n_k * C

    D_pad = _round_up(D, 128)
    F_pad = _round_up(max(F, 128), 128)
    P_pad = _round_up(max(P, 128), 128)

    TB = B if block_b is None else block_b
    assert B % TB == 0, "batch must be divisible by the batch tile"
    assert TB == B or TB % 8 == 0, "batch tile must be a multiple of 8"
    # VMEM budget note: per step x tile is TB * L_pad * D_pad * 2 bytes (bf16),
    # double-buffered. Size TB so 2 * tile <= ~40 MiB to stay safe on v7x's
    # 64 MiB VMEM; v5e/v6e (128 MiB) can take ~2x larger tiles.

    L_pad = L + 2 * PAD_MAX

    # Pad L (zero 'same' padding) and D (lane alignment), put L_pad leading so
    # shifted windows are cheap leading-axis slices, cast to bf16.
    xp = jnp.pad(x, ((0, 0), (PAD_MAX, PAD_MAX), (0, D_pad - D)))
    xp = jnp.transpose(xp, (1, 0, 2)).astype(jnp.bfloat16)      # (L_pad, B, D_pad)

    # Fuse the three conv branches into one zero-padded weight stack + bias.
    w_stack = jnp.zeros((K_MAX, D_pad, F_pad), jnp.float32)
    b_conv = jnp.zeros((1, F_pad), jnp.float32)
    for idx, k in enumerate(KERNEL_SIZES_CONTEXT):
        p = k // 2
        w = conv_ws[idx]                                        # (k, D, C)
        for j in range(k):
            s = PAD_MAX - p + j
            w_stack = w_stack.at[s, :D, idx * C:(idx + 1) * C].set(w[j])
        b_conv = b_conv.at[0, idx * C:(idx + 1) * C].set(conv_bs[idx][0])
    w_stack = w_stack.astype(jnp.bfloat16)

    # Dense layer, transposed + zero-padded (padded channels contribute 0).
    wd_pad = jnp.zeros((F_pad, P_pad), jnp.float32).at[:F, :P].set(wd.T)
    bd_pad = jnp.zeros((1, P_pad), jnp.float32).at[:, :P].set(bd)

    def full_spec(shape):
        n = len(shape)
        return pl.BlockSpec(shape, lambda b, _n=n: (0,) * _n)

    out = pl.pallas_call(
        igcn5_kernel,
        out_shape=jax.ShapeDtypeStruct((B, P_pad), jnp.float32),
        grid_spec=pltpu.PrefetchScalarGridSpec(
            num_scalar_prefetch=0,
            grid=(B // TB,),
            in_specs=[
                pl.BlockSpec((L_pad, TB, D_pad), lambda b: (0, b, 0)),
                full_spec(w_stack.shape),
                full_spec(b_conv.shape),
                full_spec(wd_pad.shape),
                full_spec(bd_pad.shape),
            ],
            out_specs=pl.BlockSpec((TB, P_pad), lambda b: (b, 0)),
        ),
        compiler_params=pltpu.CompilerParams(
            dimension_semantics=("parallel",)),
    )(xp, w_stack, b_conv, wd_pad, bd_pad)
    return out[:, :P]


def reference(x, conv_ws, conv_bs, wd, bd):
    """Pure-JAX reference of the same forward semantics (f32 math)."""
    B, L, _ = x.shape
    pooled = []
    for w, bvec, k in zip(conv_ws, conv_bs, KERNEL_SIZES_CONTEXT):
        p = k // 2
        xp = jnp.pad(x, ((0, 0), (p, p), (0, 0)))
        acc = jnp.zeros((B, L, w.shape[-1]), jnp.float32)
        for j in range(k):
            acc = acc + jnp.einsum('bld,dc->blc', xp[:, j:j + L, :], w[j])
        act = jnp.maximum(acc + bvec[None], 0.0)
        pooled.append(jnp.max(act, axis=1))
    feat = jnp.concatenate(pooled, axis=-1)          # (B, final_dim)
    return feat @ wd.T + bd                          # dense


if __name__ == "__main__":
    # Small shapes consistent with the module (batch tiled 2 grid steps).
    B, L = 16, 8
    TB = 8                  # batch tile per grid step (multiple of 8)
    EMB_DIM = 32            # opt.embed_dim before "+= 36"
    POS_TAG_DIM = 36        # pos_matrix embedding width (the "+36")
    POSITION_DIM = 100      # opt.position_dim = 100
    D = EMB_DIM + POS_TAG_DIM + POSITION_DIM          # cnn input channels = 168
    IN_CHANNELS = 8         # opt.in_channels
    POLARITIES = 3          # opt.polarities_dim
    VOCAB, POS_VOCAB = 50, 20
    MAX_SEQ_LEN = L + 100   # opt.max_seq_len += 100

    key = jax.random.PRNGKey(0)
    ks = jax.random.split(key, 12)

    # Deterministic synthetic parameters (no checkpoint loading).
    embedding_matrix = 0.1 * jax.random.normal(ks[0], (VOCAB, EMB_DIM), jnp.float32)
    pos_matrix = 0.1 * jax.random.normal(ks[1], (POS_VOCAB, POS_TAG_DIM), jnp.float32)
    position_table = 0.1 * jax.random.normal(ks[2], (MAX_SEQ_LEN, POSITION_DIM), jnp.float32)

    conv_ws, conv_bs = [], []
    for i, k in enumerate(KERNEL_SIZES_CONTEXT):
        scale = 1.0 / float(D * k) ** 0.5
        conv_ws.append(scale * jax.random.normal(ks[3 + i], (k, D, IN_CHANNELS), jnp.float32))
        conv_bs.append(0.01 * jax.random.normal(ks[6 + i], (1, IN_CHANNELS), jnp.float32))

    FINAL_DIM = len(KERNEL_SIZES_CONTEXT) * IN_CHANNELS
    wd = jax.random.normal(ks[9], (POLARITIES, FINAL_DIM), jnp.float32) / float(FINAL_DIM) ** 0.5
    bd = 0.01 * jax.random.normal(ks[10], (1, POLARITIES), jnp.float32)

    # Inputs (aspect_indices / aspect_pos_indices are unused by forward()).
    k_in = jax.random.split(ks[11], 3)
    text_raw_indices = jax.random.randint(k_in[0], (B, L), 0, VOCAB)
    pos_indices = jax.random.randint(k_in[1], (B, L), 0, POS_VOCAB)
    position_indices = jax.random.randint(k_in[2], (B, L), 0, MAX_SEQ_LEN)

    # Glue: embedding gathers + concat (context, pos_tags, position).
    context = embedding_matrix[text_raw_indices]          # (B, L, 32)
    pos_tags = pos_matrix[pos_indices]                    # (B, L, 36)
    position = position_table[position_indices]           # (B, L, 100)
    x = jnp.concatenate([context, pos_tags, position], axis=-1)   # (B, L, 168)
    # TODO(synk): nn.Dropout treated as identity (inference mode).

    out = igcn5_forward(x, conv_ws, conv_bs, wd, bd, block_b=TB)
    jax.block_until_ready(out)

    # Reference on bf16-rounded x / conv weights (matches the kernel's bf16 MXU
    # inputs; both accumulate in f32), dense in f32 as in the kernel.
    rnd = lambda a: a.astype(jnp.bfloat16).astype(jnp.float32)
    ref = reference(rnd(x), [rnd(w) for w in conv_ws], conv_bs, wd, bd)

    assert out.shape == (B, POLARITIES)
    assert jnp.allclose(out, ref, atol=2e-3, rtol=2e-3), (out, ref)
    print("KERNEL_OK")
</pallas_src>

<mosaic_0001>
module attributes {stable_mosaic.version = 11 : i64} {
  func.func @igcn5_kernel(%arg0: i32, %arg1: memref<12x8x256xbf16, #tpu.memory_space<vmem>>, %arg2: memref<5x256x128xbf16, #tpu.memory_space<vmem>>, %arg3: memref<1x128xf32, #tpu.memory_space<vmem>>, %arg4: memref<128x128xf32, #tpu.memory_space<vmem>>, %arg5: memref<1x128xf32, #tpu.memory_space<vmem>>, %arg6: memref<8x128xf32, #tpu.memory_space<vmem>>) attributes {dimension_semantics = [#tpu.dimension_semantics<parallel>], iteration_bounds = array<i64: 2>, scalar_prefetch = 0 : i64, scratch_operands = 0 : i64, tpu.core_type = #tpu.core_type<tc>, window_params = [{transform_indices = @transform_0, window_bounds = array<i64: 12, 8, 256>}, {pipeline_mode = #tpu.pipeline_mode<synchronous>, transform_indices = @transform_1, window_bounds = array<i64: 5, 256, 128>}, {pipeline_mode = #tpu.pipeline_mode<synchronous>, transform_indices = @transform_2, window_bounds = array<i64: 1, 128>}, {pipeline_mode = #tpu.pipeline_mode<synchronous>, transform_indices = @transform_3, window_bounds = array<i64: 128, 128>}, {pipeline_mode = #tpu.pipeline_mode<synchronous>, transform_indices = @transform_4, window_bounds = array<i64: 1, 128>}, {transform_indices = @transform_5, window_bounds = array<i64: 8, 128>}]} {
    %cst = arith.constant 0.000000e+00 : f32
    %0 = vector.broadcast %cst : f32 to vector<64x128xf32>
    %c0 = arith.constant 0 : index
    %c0_0 = arith.constant 0 : index
    %c0_1 = arith.constant 0 : index
    %1 = vector.load %arg1[%c0, %c0_0, %c0_1] : memref<12x8x256xbf16, #tpu.memory_space<vmem>>, vector<8x8x256xbf16>
    %2 = vector.shape_cast %1 : vector<8x8x256xbf16> to vector<64x256xbf16>
    %c0_2 = arith.constant 0 : index
    %c0_3 = arith.constant 0 : index
    %c0_4 = arith.constant 0 : index
    %3 = vector.load %arg2[%c0_2, %c0_3, %c0_4] : memref<5x256x128xbf16, #tpu.memory_space<vmem>>, vector<1x256x128xbf16>
    %4 = vector.shape_cast %3 : vector<1x256x128xbf16> to vector<256x128xbf16>
    %cst_5 = arith.constant dense<0.000000e+00> : vector<64x128xf32>
    %5 = tpu.matmul %2, %4, %cst_5 {dimension_numbers = #tpu.dot_dimension_numbers<[1], [0], [0], [1], [0, 0, 1, 1], [], []>} : vector<64x256xbf16>, vector<256x128xbf16>, vector<64x128xf32> -> vector<64x128xf32>
    %6 = arith.addf %0, %5 : vector<64x128xf32>
    %c1 = arith.constant 1 : index
    %c0_6 = arith.constant 0 : index
    %c0_7 = arith.constant 0 : index
    %7 = vector.load %arg1[%c1, %c0_6, %c0_7] : memref<12x8x256xbf16, #tpu.memory_space<vmem>>, vector<8x8x256xbf16>
    %8 = vector.shape_cast %7 : vector<8x8x256xbf16> to vector<64x256xbf16>
    %c1_8 = arith.constant 1 : index
    %c0_9 = arith.constant 0 : index
    %c0_10 = arith.constant 0 : index
    %9 = vector.load %arg2[%c1_8, %c0_9, %c0_10] : memref<5x256x128xbf16, #tpu.memory_space<vmem>>, vector<1x256x128xbf16>
    %10 = vector.shape_cast %9 : vector<1x256x128xbf16> to vector<256x128xbf16>
    %cst_11 = arith.constant dense<0.000000e+00> : vector<64x128xf32>
    %11 = tpu.matmul %8, %10, %cst_11 {dimension_numbers = #tpu.dot_dimension_numbers<[1], [0], [0], [1], [0, 0, 1, 1], [], []>} : vector<64x256xbf16>, vector<256x128xbf16>, vector<64x128xf32> -> vector<64x128xf32>
    %12 = arith.addf %6, %11 : vector<64x128xf32>
    %c2 = arith.constant 2 : index
    %c0_12 = arith.constant 0 : index
    %c0_13 = arith.constant 0 : index
    %13 = vector.load %arg1[%c2, %c0_12, %c0_13] : memref<12x8x256xbf16, #tpu.memory_space<vmem>>, vector<8x8x256xbf16>
    %14 = vector.shape_cast %13 : vector<8x8x256xbf16> to vector<64x256xbf16>
    %c2_14 = arith.constant 2 : index
    %c0_15 = arith.constant 0 : index
    %c0_16 = arith.constant 0 : index
    %15 = vector.load %arg2[%c2_14, %c0_15, %c0_16] : memref<5x256x128xbf16, #tpu.memory_space<vmem>>, vector<1x256x128xbf16>
    %16 = vector.shape_cast %15 : vector<1x256x128xbf16> to vector<256x128xbf16>
    %cst_17 = arith.constant dense<0.000000e+00> : vector<64x128xf32>
    %17 = tpu.matmul %14, %16, %cst_17 {dimension_numbers = #tpu.dot_dimension_numbers<[1], [0], [0], [1], [0, 0, 1, 1], [], []>} : vector<64x256xbf16>, vector<256x128xbf16>, vector<64x128xf32> -> vector<64x128xf32>
    %18 = arith.addf %12, %17 : vector<64x128xf32>
    %c3 = arith.constant 3 : index
    %c0_18 = arith.constant 0 : index
    %c0_19 = arith.constant 0 : index
    %19 = vector.load %arg1[%c3, %c0_18, %c0_19] : memref<12x8x256xbf16, #tpu.memory_space<vmem>>, vector<8x8x256xbf16>
    %20 = vector.shape_cast %19 : vector<8x8x256xbf16> to vector<64x256xbf16>
    %c3_20 = arith.constant 3 : index
    %c0_21 = arith.constant 0 : index
    %c0_22 = arith.constant 0 : index
    %21 = vector.load %arg2[%c3_20, %c0_21, %c0_22] : memref<5x256x128xbf16, #tpu.memory_space<vmem>>, vector<1x256x128xbf16>
    %22 = vector.shape_cast %21 : vector<1x256x128xbf16> to vector<256x128xbf16>
    %cst_23 = arith.constant dense<0.000000e+00> : vector<64x128xf32>
    %23 = tpu.matmul %20, %22, %cst_23 {dimension_numbers = #tpu.dot_dimension_numbers<[1], [0], [0], [1], [0, 0, 1, 1], [], []>} : vector<64x256xbf16>, vector<256x128xbf16>, vector<64x128xf32> -> vector<64x128xf32>
    %24 = arith.addf %18, %23 : vector<64x128xf32>
    %c4 = arith.constant 4 : index
    %c0_24 = arith.constant 0 : index
    %c0_25 = arith.constant 0 : index
    %25 = vector.load %arg1[%c4, %c0_24, %c0_25] : memref<12x8x256xbf16, #tpu.memory_space<vmem>>, vector<8x8x256xbf16>
    %26 = vector.shape_cast %25 : vector<8x8x256xbf16> to vector<64x256xbf16>
    %c4_26 = arith.constant 4 : index
    %c0_27 = arith.constant 0 : index
    %c0_28 = arith.constant 0 : index
    %27 = vector.load %arg2[%c4_26, %c0_27, %c0_28] : memref<5x256x128xbf16, #tpu.memory_space<vmem>>, vector<1x256x128xbf16>
    %28 = vector.shape_cast %27 : vector<1x256x128xbf16> to vector<256x128xbf16>
    %cst_29 = arith.constant dense<0.000000e+00> : vector<64x128xf32>
    %29 = tpu.matmul %26, %28, %cst_29 {dimension_numbers = #tpu.dot_dimension_numbers<[1], [0], [0], [1], [0, 0, 1, 1], [], []>} : vector<64x256xbf16>, vector<256x128xbf16>, vector<64x128xf32> -> vector<64x128xf32>
    %30 = arith.addf %24, %29 : vector<64x128xf32>
    %c0_30 = arith.constant 0 : index
    %c0_31 = arith.constant 0 : index
    %31 = vector.load %arg3[%c0_30, %c0_31] : memref<1x128xf32, #tpu.memory_space<vmem>>, vector<1x128xf32>
    %32 = vector.broadcast %31 : vector<1x128xf32> to vector<64x128xf32>
    %33 = arith.addf %30, %32 : vector<64x128xf32>
    %cst_32 = arith.constant 0.000000e+00 : f32
    %34 = vector.broadcast %cst_32 : f32 to vector<64x128xf32>
    %35 = arith.maximumf %33, %34 : vector<64x128xf32>
    %36 = vector.shape_cast %35 : vector<64x128xf32> to vector<8x8x128xf32>
    %cst_33 = arith.constant dense<0xFF800000> : vector<8x128xf32>
    %37 = vector.multi_reduction <maximumf>, %36, %cst_33 [0] : vector<8x8x128xf32> to vector<8x128xf32>
    %c0_34 = arith.constant 0 : index
    %c0_35 = arith.constant 0 : index
    %38 = vector.load %arg4[%c0_34, %c0_35] : memref<128x128xf32, #tpu.memory_space<vmem>>, vector<128x128xf32>
    %cst_36 = arith.constant dense<0.000000e+00> : vector<8x128xf32>
    %39 = tpu.matmul %37, %38, %cst_36 {dimension_numbers = #tpu.dot_dimension_numbers<[1], [0], [0], [1], [0, 0, 1, 1], [], []>} : vector<8x128xf32>, vector<128x128xf32>, vector<8x128xf32> -> vector<8x128xf32>
    %c0_37 = arith.constant 0 : index
    %c0_38 = arith.constant 0 : index
    %40 = vector.load %arg5[%c0_37, %c0_38] : memref<1x128xf32, #tpu.memory_space<vmem>>, vector<1x128xf32>
    %41 = vector.broadcast %40 : vector<1x128xf32> to vector<8x128xf32>
    %42 = arith.addf %39, %41 : vector<8x128xf32>
    %c0_39 = arith.constant 0 : index
    %c0_40 = arith.constant 0 : index
    %43 = vector.load %arg6[%c0_39, %c0_40] : memref<8x128xf32, #tpu.memory_space<vmem>>, vector<8x128xf32>
    tpu.vector_store %arg6[%c0_39, %c0_40], %42 {strides = array<i32>} : memref<8x128xf32, #tpu.memory_space<vmem>>, vector<8x128xf32>,
    return
  }
  func.func @transform_0(%arg0: i32) -> (i32, i32, i32) {
    %c0_i32 = arith.constant 0 : i32
    %c0_i32_0 = arith.constant 0 : i32
    %c0_i32_1 = arith.constant 0 : i32
    return %c0_i32, %arg0, %c0_i32_0 : i32, i32, i32
  }
  func.func @transform_1(%arg0: i32) -> (i32, i32, i32) {
    %c0_i32 = arith.constant 0 : i32
    %c0_i32_0 = arith.constant 0 : i32
    %c0_i32_1 = arith.constant 0 : i32
    %c0_i32_2 = arith.constant 0 : i32
    return %c0_i32, %c0_i32_0, %c0_i32_1 : i32, i32, i32
  }
  func.func @transform_2(%arg0: i32) -> (i32, i32) {
    %c0_i32 = arith.constant 0 : i32
    %c0_i32_0 = arith.constant 0 : i32
    %c0_i32_1 = arith.constant 0 : i32
    return %c0_i32, %c0_i32_0 : i32, i32
  }
  func.func @transform_3(%arg0: i32) -> (i32, i32) {
    %c0_i32 = arith.constant 0 : i32
    %c0_i32_0 = arith.constant 0 : i32
    %c0_i32_1 = arith.constant 0 : i32
    return %c0_i32, %c0_i32_0 : i32, i32
  }
  func.func @transform_4(%arg0: i32) -> (i32, i32) {
    %c0_i32 = arith.constant 0 : i32
    %c0_i32_0 = arith.constant 0 : i32
    %c0_i32_1 = arith.constant 0 : i32
    return %c0_i32, %c0_i32_0 : i32, i32
  }
  func.func @transform_5(%arg0: i32) -> (i32, i32) {
    %c0_i32 = arith.constant 0 : i32
    %c0_i32_0 = arith.constant 0 : i32
    return %arg0, %c0_i32 : i32, i32
  }
}

</mosaic_0001>

<llo_original>
// kernel: tpu_custom_call.1
$region0: #{tpu_custom_call.1}
  #allocation0 [shape = 'u32[]', space=smem, size = 0x4, offset = 0x4, fixed_abs, tag = 'smem constant byte address 0x4 - core index']
  #allocation1 [shape = 'u32[144,128]{1,0:T(1,128)}', space=vmem, size = 0x12000, scoped, tag = 'internal scratch']
  %s0 = inlined_call_operand.hbm [shape: bf16[12,16,256], index: 0, kind: input, shape index: {}]
  %s1 = inlined_call_operand.hbm [shape: bf16[5,256,128], index: 1, kind: input, shape index: {}]
  %s2 = inlined_call_operand.vmem [shape: f32[1,128], index: 2, kind: input, shape index: {}]
  %s3 = inlined_call_operand.hbm [shape: f32[128,128], index: 3, kind: input, shape index: {}]
  %s4 = inlined_call_operand.vmem [shape: f32[1,128], index: 4, kind: input, shape index: {}]
  %s5 = inlined_call_operand.hbm [shape: f32[16,128], index: 5, kind: output, shape index: {}]
  %s6 = sld [smem:[#allocation0]]
  $region65: #{tpu_custom_call.1} parent=0
    _
  %s8 = ssub.s32 1, %s6
  %s9 = scalar_select 0, %s8, %s6
  $region1: #{tpu_custom_call.1} parent=0
    #allocation2 [shape = 'u8[98304]{0}', space=vmem, size = 0x18000, scoped, tag = 'input window, operand 0']
    #allocation3 [shape = 's32[2]{0}', space=sflag, size = 0x8, scoped, tag = 'scoped memory for tpu_custom_call.1']
    #allocation4 [shape = 's32[2]{0}', space=sflag, size = 0x8, scoped, tag = 'scoped memory for tpu_custom_call.1']
    #allocation5 [shape = 'u8[327680]{0}', space=vmem, size = 0x50000, scoped, tag = 'input window, operand 1, single buffered']
    #allocation6 [shape = 's32[1]{0}', space=sflag, size = 0x4, scoped, tag = 'scoped memory for tpu_custom_call.1']
    #allocation7 [shape = 'u8[65536]{0}', space=vmem, size = 0x10000, scoped, tag = 'input window, operand 3, single buffered']
    #allocation8 [shape = 'u8[8192]{0}', space=vmem, size = 0x2000, scoped, tag = 'output window, operand 0']
    %10 = vsyncpa [#allocation3], 0
    %s11 = scalar_lea.sflag [#allocation3], 1
    %12 = vsyncpa %s11, 0
    %13 = vsyncpa [#allocation6], 0
    %14 = vsyncpa [#allocation4], 0
    %s15 = scalar_lea.sflag [#allocation4], 1
    %16 = vsyncpa %s15, 0
    loop: start=0, step=1, limit=4
    $region2: #{tpu_custom_call.1} parent=1 // loop_pre_header
      _
    $region3: #{tpu_custom_call.1} parent=1 // loop_header
      %s18 = sphi 0, %s22
      %p19 = scmp.ge.s32.totalorder %s18, 4
      %s28 = sphi 0, %s30
      %s31 = sphi 0, %s28
      %s32 = sphi 0, %s31
      %s48 = sphi 0, %s32
      %s52 = sphi 0, %s52
      %s54 = sphi 0, %s52
      %s55 = sphi 0, %s54
      %s69 = sphi 0, %s55
      %s73 = sphi 0, %s73
      %s75 = sphi 0, %s73
      %s76 = sphi 0, %s75
      %s90 = sphi 0, %s76
      %s94 = sphi 0, %s94
      %s96 = sphi 0, %s94
      %s97 = sphi 0, %s96
      %s111 = sphi 0, %s97
      %s115 = sphi 0, %s115
      %s117 = sphi 0, %s115
      %s118 = sphi 0, %s117
      %s132 = sphi 0, %s118
      %s138 = sphi 0, %s140
      %s141 = sphi 0, %s138
      %s142 = sphi 0, %s141
      %s158 = sphi 0, %s142
    $region4: #{tpu_custom_call.1} parent=1 // loop_header_branch
      %21 = sbr.rel (%p19) target = $region8
    $region5: #{tpu_custom_call.1} parent=1 // loop_body
      %s23 = ssub.s32 %s18, 1
      %s24 = ssub.s32 %s18, 2
      %s25 = sadd.s32 %s18, 1
      %s26 = ssub.s32 %s18, %s25
      %p27 = scmp.eq.s32.totalorder %s26, 0
      %s29 = sadd.s32 %s28, 1
      %s30 = scalar_select %p27, %s28, %s29
      %p33 = pneg %p27
      %p34 = scmp.eq.s32.totalorder %s18, 1
      %p35 = por %p33, %p34
      %p36 = scmp.ne.s32.totalorder %s28, %s31
      %p37 = scmp.eq.s32.totalorder %s18, 0
      %p38 = por %p36, %p37
      %p39 = scmp.ne.s32.totalorder %s28, %s31
      %p40 = scmp.eq.s32.totalorder %s23, 1
      %p41 = por %p39, %p40
      %p42 = scmp.ne.s32.totalorder %s31, %s32
      %p43 = scmp.eq.s32.totalorder %s23, 0
      %p44 = por %p42, %p43
      %p45 = scmp.ne.s32.totalorder %s31, %s32
      %p46 = scmp.eq.s32.totalorder %s24, 1
      %p47 = por %p45, %p46
      %p49 = scmp.ne.s32.totalorder %s32, %s48
      %p50 = scmp.eq.s32.totalorder %s24, 0
      %p51 = por %p49, %p50
      %s53 = sadd.s32 %s52, 1
      %p56 = scmp.eq.s32.totalorder %s18, 1
      %p57 = scmp.ne.s32.totalorder %s52, %s54
      %p58 = scmp.eq.s32.totalorder %s18, 0
      %p59 = por %p57, %p58
      %p60 = scmp.ne.s32.totalorder %s52, %s54
      %p61 = scmp.eq.s32.totalorder %s23, 1
      %p62 = por %p60, %p61
      %p63 = scmp.ne.s32.totalorder %s54, %s55
      %p64 = scmp.eq.s32.totalorder %s23, 0
      %p65 = por %p63, %p64
      %p66 = scmp.ne.s32.totalorder %s54, %s55
      %p67 = scmp.eq.s32.totalorder %s24, 1
      %p68 = por %p66, %p67
      %p70 = scmp.ne.s32.totalorder %s55, %s69
      %p71 = scmp.eq.s32.totalorder %s24, 0
      %p72 = por %p70, %p71
      %s74 = sadd.s32 %s73, 1
      %p77 = scmp.eq.s32.totalorder %s18, 1
      %p78 = scmp.ne.s32.totalorder %s73, %s75
      %p79 = scmp.eq.s32.totalorder %s18, 0
      %p80 = por %p78, %p79
      %p81 = scmp.ne.s32.totalorder %s73, %s75
      %p82 = scmp.eq.s32.totalorder %s23, 1
      %p83 = por %p81, %p82
      %p84 = scmp.ne.s32.totalorder %s75, %s76
      %p85 = scmp.eq.s32.totalorder %s23, 0
      %p86 = por %p84, %p85
      %p87 = scmp.ne.s32.totalorder %s75, %s76
      %p88 = scmp.eq.s32.totalorder %s24, 1
      %p89 = por %p87, %p88
      %p91 = scmp.ne.s32.totalorder %s76, %s90
      %p92 = scmp.eq.s32.totalorder %s24, 0
      %p93 = por %p91, %p92
      %s95 = sadd.s32 %s94, 1
      %p98 = scmp.eq.s32.totalorder %s18, 1
      %p99 = scmp.ne.s32.totalorder %s94, %s96
      %p100 = scmp.eq.s32.totalorder %s18, 0
      %p101 = por %p99, %p100
      %p102 = scmp.ne.s32.totalorder %s94, %s96
      %p103 = scmp.eq.s32.totalorder %s23, 1
      %p104 = por %p102, %p103
      %p105 = scmp.ne.s32.totalorder %s96, %s97
      %p106 = scmp.eq.s32.totalorder %s23, 0
      %p107 = por %p105, %p106
      %p108 = scmp.ne.s32.totalorder %s96, %s97
      %p109 = scmp.eq.s32.totalorder %s24, 1
      %p110 = por %p108, %p109
      %p112 = scmp.ne.s32.totalorder %s97, %s111
      %p113 = scmp.eq.s32.totalorder %s24, 0
      %p114 = por %p112, %p113
      %s116 = sadd.s32 %s115, 1
      %p119 = scmp.eq.s32.totalorder %s18, 1
      %p120 = scmp.ne.s32.totalorder %s115, %s117
      %p121 = scmp.eq.s32.totalorder %s18, 0
      %p122 = por %p120, %p121
      %p123 = scmp.ne.s32.totalorder %s115, %s117
      %p124 = scmp.eq.s32.totalorder %s23, 1
      %p125 = por %p123, %p124
      %p126 = scmp.ne.s32.totalorder %s117, %s118
      %p127 = scmp.eq.s32.totalorder %s23, 0
      %p128 = por %p126, %p127
      %p129 = scmp.ne.s32.totalorder %s117, %s118
      %p130 = scmp.eq.s32.totalorder %s24, 1
      %p131 = por %p129, %p130
      %p133 = scmp.ne.s32.totalorder %s118, %s132
      %p134 = scmp.eq.s32.totalorder %s24, 0
      %p135 = por %p133, %p134
      %s136 = ssub.s32 %s18, %s25
      %p137 = scmp.eq.s32.totalorder %s136, 0
      %s139 = sadd.s32 %s138, 1
      %s140 = scalar_select %p137, %s138, %s139
      %p143 = pneg %p137
      %p144 = scmp.eq.s32.totalorder %s18, 1
      %p145 = por %p143, %p144
      %p146 = scmp.ne.s32.totalorder %s138, %s141
      %p147 = scmp.eq.s32.totalorder %s18, 0
      %p148 = por %p146, %p147
      %p149 = scmp.ne.s32.totalorder %s138, %s141
      %p150 = scmp.eq.s32.totalorder %s23, 1
      %p151 = por %p149, %p150
      %p152 = scmp.ne.s32.totalorder %s141, %s142
      %p153 = scmp.eq.s32.totalorder %s23, 0
      %p154 = por %p152, %p153
      %p155 = scmp.ne.s32.totalorder %s141, %s142
      %p156 = scmp.eq.s32.totalorder %s24, 1
      %p157 = por %p155, %p156
      %p159 = scmp.ne.s32.totalorder %s142, %s158
      %p160 = scmp.eq.s32.totalorder %s24, 0
      %p161 = por %p159, %p160
      %p162 = scmp.le.s32.totalorder 1, %s18
      %p163 = scmp.lt.s32.totalorder %s18, 3
      %p164 = pnand %p162, %p163
      %p165 = pneg %p164
      // Predicated region
      $region9: #{tpu_custom_call.1} parent=5 // pred_check
        _
      $region10: #{tpu_custom_call.1} parent=5 // pred_check_branch
        %167 = sbr.rel (%p164) target = $region12
      $region11: #{tpu_custom_call.1} parent=5 // pred_region
        %s168 = ssub.s32 %s18, 1
        // Predicated region
        $region13: #{tpu_custom_call.1} parent=11 // pred_check
          %p169 = pneg %p65
        $region14: #{tpu_custom_call.1} parent=11 // pred_check_branch
          %171 = sbr.rel (%p169) target = $region16
        $region15: #{tpu_custom_call.1} parent=11 // pred_region
          %s173 = ssub.s32 10240, 10240
          %174 = vsyncadd [#allocation6], %s173
          %s175 = sshll.u32 [#allocation5], 4
          %s176 = int_to_ptr.vmem [resolvable:$true] %s175
          %181 = dma.hbm_to_vmem [thread:$0]  %s1, 10240, %s176, [#allocation6], 64, 64, 4
        $region16: #{tpu_custom_call.1} parent=11 // pred_fallthru
          _
        // Predicated region
        $region17: #{tpu_custom_call.1} parent=11 // pred_check
          %p182 = pneg %p86
        $region18: #{tpu_custom_call.1} parent=11 // pred_check_branch
          %184 = sbr.rel (%p182) target = $region20
        $region19: #{tpu_custom_call.1} parent=11 // pred_region
          _
        $region20: #{tpu_custom_call.1} parent=11 // pred_fallthru
          _
        // Predicated region
        $region21: #{tpu_custom_call.1} parent=11 // pred_check
          %p185 = pneg %p107
        $region22: #{tpu_custom_call.1} parent=11 // pred_check_branch
          %187 = sbr.rel (%p185) target = $region24
        $region23: #{tpu_custom_call.1} parent=11 // pred_region
          %s189 = ssub.s32 2048, 2048
          %190 = vsyncadd [#allocation6], %s189
          %s191 = sshll.u32 [#allocation7], 4
          %s192 = int_to_ptr.vmem [resolvable:$true] %s191
          %197 = dma.hbm_to_vmem [thread:$0]  %s3, 2048, %s192, [#allocation6], 128, 128, 8
        $region24: #{tpu_custom_call.1} parent=11 // pred_fallthru
          _
        // Predicated region
        $region25: #{tpu_custom_call.1} parent=11 // pred_check
          %p198 = pneg %p128
        $region26: #{tpu_custom_call.1} parent=11 // pred_check_branch
          %200 = sbr.rel (%p198) target = $region28
        $region27: #{tpu_custom_call.1} parent=11 // pred_region
          _
        $region28: #{tpu_custom_call.1} parent=11 // pred_fallthru
          _
      $region12: #{tpu_custom_call.1} parent=5 // pred_fallthru
        _
      %p201 = scmp.lt.s32.totalorder %s18, 2
      // Predicated region
      $region29: #{tpu_custom_call.1} parent=5 // pred_check
        %p202 = pneg %p201
      $region30: #{tpu_custom_call.1} parent=5 // pred_check_branch
        %204 = sbr.rel (%p202) target = $region32
      $region31: #{tpu_custom_call.1} parent=5 // pred_region
        // Predicated region
        $region33: #{tpu_custom_call.1} parent=31 // pred_check
          %p205 = pneg %p38
        $region34: #{tpu_custom_call.1} parent=31 // pred_check_branch
          %207 = sbr.rel (%p205) target = $region36
        $region35: #{tpu_custom_call.1} parent=31 // pred_region
          %s208 = sand.u32 %s28, 1
          %s209 = scalar_lea.sflag [#allocation3], %s208
          %s210 = sand.u32 %s28, 1
          %s211 = smul.addr %s210, 96
          %s212 = scalar_lea.vmem [#allocation2], %s211
          %s214 = ssub.s32 1536, 1536
          %215 = vsyncadd %s209, %s214
          %s216 = smul.addr %s18, 2
          %s217 = smul.addr %s216, 64
          %s218 = scalar_lea.hbm %s0, %s217
          %s219 = sshll.u32 %s212, 4
          %s220 = int_to_ptr.vmem [resolvable:$true] %s219
          %225 = dma.hbm_to_vmem [thread:$0]  %s218, 1536, %s220, %s209, 256, 128, 8
        $region36: #{tpu_custom_call.1} parent=31 // pred_fallthru
          _
      $region32: #{tpu_custom_call.1} parent=5 // pred_fallthru
        _
      %p226 = scmp.le.s32.totalorder 1, %s18
      %p227 = scmp.lt.s32.totalorder %s18, 3
      %p228 = pnand %p226, %p227
      %p229 = pneg %p228
      // Predicated region
      $region37: #{tpu_custom_call.1} parent=5 // pred_check
        _
      $region38: #{tpu_custom_call.1} parent=5 // pred_check_branch
        %231 = sbr.rel (%p228) target = $region40
      $region39: #{tpu_custom_call.1} parent=5 // pred_region
        %s232 = ssub.s32 %s18, 1
        %s233 = sand.u32 %s31, 1
        %s234 = scalar_lea.sflag [#allocation3], %s233
        %s235 = sand.u32 %s31, 1
        %s236 = smul.addr %s235, 96
        %s237 = scalar_lea.vmem [#allocation2], %s236
        // Predicated region
        $region41: #{tpu_custom_call.1} parent=39 // pred_check
          %p238 = pneg %p44
        $region42: #{tpu_custom_call.1} parent=39 // pred_check_branch
          %240 = sbr.rel (%p238) target = $region44
        $region43: #{tpu_custom_call.1} parent=39 // pred_region
          %241 = dma.done %s234, 1536
        $region44: #{tpu_custom_call.1} parent=39 // pred_fallthru
          _
        // Predicated region
        $region45: #{tpu_custom_call.1} parent=39 // pred_check
          %p242 = pneg %p65
        $region46: #{tpu_custom_call.1} parent=39 // pred_check_branch
          %244 = sbr.rel (%p242) target = $region48
        $region47: #{tpu_custom_call.1} parent=39 // pred_region
          %245 = dma.done [#allocation6], 10240
        $region48: #{tpu_custom_call.1} parent=39 // pred_fallthru
          _
        // Predicated region
        $region49: #{tpu_custom_call.1} parent=39 // pred_check
          %p246 = pneg %p107
        $region50: #{tpu_custom_call.1} parent=39 // pred_check_branch
          %248 = sbr.rel (%p246) target = $region52
        $region51: #{tpu_custom_call.1} parent=39 // pred_region
          %249 = dma.done [#allocation6], 2048
        $region52: #{tpu_custom_call.1} parent=39 // pred_fallthru
          _
        %s250 = sand.u32 %s31, 1
        %s251 = scalar_lea.sflag [#allocation3], %s250
        %s252 = sand.u32 %s31, 1
        %s253 = smul.addr %s252, 96
        %s254 = scalar_lea.vmem [#allocation2], %s253
        %p255 = pneg %p44
        %p256 = pneg %p41
        %p257 = pneg %p65
        %p258 = pneg %p62
        %p259 = pneg %p86
        %p260 = pneg %p83
        %p261 = pneg %p107
        %p262 = pneg %p104
        %p263 = pneg %p128
        %p264 = pneg %p125
        %p265 = pneg %p154
        %p266 = pneg %p151
        %s267 = sand.u32 %s141, 1
        %s268 = scalar_lea.sflag [#allocation4], %s267
        %s269 = sand.u32 %s141, 1
        %s270 = smul.addr %s269, 8
        %s271 = scalar_lea.vmem [#allocation8], %s270
        %v273 = vld [vmem:[%s237] sm:$0xff]
        %v274 = vld [vmem:[%s237 + $0x8] sm:$0xff]
        %v275 = vld [vmem:[%s237 + $0x10] sm:$0xff]
        %v276 = vld [vmem:[%s237 + $0x18] sm:$0xff]
        %v277 = vld [vmem:[%s237 + $0x20] sm:$0xff]
        %v278 = vld [vmem:[%s237 + $0x28] sm:$0xff]
        %v279 = vld [vmem:[%s237 + $0x30] sm:$0xff]
        %v280 = vld [vmem:[%s237 + $0x38] sm:$0xff]
        %v281 = vld [vmem:[#allocation5] sm:$0xf]
        %v282 = vld [vmem:[#allocation5 + $0x4] sm:$0xf]
        %v283 = vld [vmem:[#allocation5 + $0x8] sm:$0xf]
        %v284 = vld [vmem:[#allocation5 + $0xc] sm:$0xf]
        %v285 = vld [vmem:[#allocation5 + $0x10] sm:$0xf]
        %v286 = vld [vmem:[#allocation5 + $0x14] sm:$0xf]
        %v287 = vld [vmem:[#allocation5 + $0x18] sm:$0xf]
        %v288 = vld [vmem:[#allocation5 + $0x1c] sm:$0xf]
        %v289 = vld [vmem:[#allocation5 + $0x20] sm:$0xf]
        %v290 = vld [vmem:[#allocation5 + $0x24] sm:$0xf]
        %v291 = vld [vmem:[#allocation5 + $0x28] sm:$0xf]
        %v292 = vld [vmem:[#allocation5 + $0x2c] sm:$0xf]
        %v293 = vld [vmem:[#allocation5 + $0x30] sm:$0xf]
        %v294 = vld [vmem:[#allocation5 + $0x34] sm:$0xf]
        %v295 = vld [vmem:[#allocation5 + $0x38] sm:$0xf]
        %v296 = vld [vmem:[#allocation5 + $0x3c] sm:$0xf]
        %v297 = vld [vmem:[#allocation5 + $0x40] sm:$0xf]
        %v298 = vld [vmem:[#allocation5 + $0x44] sm:$0xf]
        %v299 = vld [vmem:[#allocation5 + $0x48] sm:$0xf]
        %v300 = vld [vmem:[#allocation5 + $0x4c] sm:$0xf]
        %v301 = vld [vmem:[#allocation5 + $0x50] sm:$0xf]
        %v302 = vld [vmem:[#allocation5 + $0x54] sm:$0xf]
        %v303 = vld [vmem:[#allocation5 + $0x58] sm:$0xf]
        %v304 = vld [vmem:[#allocation5 + $0x5c] sm:$0xf]
        %v305 = vld [vmem:[#allocation5 + $0x60] sm:$0xf]
        %v306 = vld [vmem:[#allocation5 + $0x64] sm:$0xf]
        %v307 = vld [vmem:[#allocation5 + $0x68] sm:$0xf]
        %v308 = vld [vmem:[#allocation5 + $0x6c] sm:$0xf]
        %v309 = vld [vmem:[#allocation5 + $0x70] sm:$0xf]
        %v310 = vld [vmem:[#allocation5 + $0x74] sm:$0xf]
        %v311 = vld [vmem:[#allocation5 + $0x78] sm:$0xf]
        %v312 = vld [vmem:[#allocation5 + $0x7c] sm:$0xf]
        %s313 = scalar_lea.vmem %s237, 8 [#allocation2]
        %v314 = vld [vmem:[%s313] sm:$0xff]
        %v315 = vld [vmem:[%s313 + $0x8] sm:$0xff]
        %v316 = vld [vmem:[%s313 + $0x10] sm:$0xff]
        %v317 = vld [vmem:[%s313 + $0x18] sm:$0xff]
        %v318 = vld [vmem:[%s313 + $0x20] sm:$0xff]
        %v319 = vld [vmem:[%s313 + $0x28] sm:$0xff]
        %v320 = vld [vmem:[%s313 + $0x30] sm:$0xff]
        %v321 = vld [vmem:[%s313 + $0x38] sm:$0xff]
        %s322 = scalar_lea.vmem [#allocation5], 128
        %v323 = vld [vmem:[%s322] sm:$0xf]
        %v324 = vld [vmem:[%s322 + $0x4] sm:$0xf]
        %v325 = vld [vmem:[%s322 + $0x8] sm:$0xf]
        %v326 = vld [vmem:[%s322 + $0xc] sm:$0xf]
        %v327 = vld [vmem:[%s322 + $0x10] sm:$0xf]
        %v328 = vld [vmem:[%s322 + $0x14] sm:$0xf]
        %v329 = vld [vmem:[%s322 + $0x18] sm:$0xf]
        %v330 = vld [vmem:[%s322 + $0x1c] sm:$0xf]
        %v331 = vld [vmem:[%s322 + $0x20] sm:$0xf]
        %v332 = vld [vmem:[%s322 + $0x24] sm:$0xf]
        %v333 = vld [vmem:[%s322 + $0x28] sm:$0xf]
        %v334 = vld [vmem:[%s322 + $0x2c] sm:$0xf]
        %v335 = vld [vmem:[%s322 + $0x30] sm:$0xf]
        %v336 = vld [vmem:[%s322 + $0x34] sm:$0xf]
        %v337 = vld [vmem:[%s322 + $0x38] sm:$0xf]
        %v338 = vld [vmem:[%s322 + $0x3c] sm:$0xf]
        %v339 = vld [vmem:[%s322 + $0x40] sm:$0xf]
        %v340 = vld [vmem:[%s322 + $0x44] sm:$0xf]
        %v341 = vld [vmem:[%s322 + $0x48] sm:$0xf]
        %v342 = vld [vmem:[%s322 + $0x4c] sm:$0xf]
        %v343 = vld [vmem:[%s322 + $0x50] sm:$0xf]
        %v344 = vld [vmem:[%s322 + $0x54] sm:$0xf]
        %v345 = vld [vmem:[%s322 + $0x58] sm:$0xf]
        %v346 = vld [vmem:[%s322 + $0x5c] sm:$0xf]
        %v347 = vld [vmem:[%s322 + $0x60] sm:$0xf]
        %v348 = vld [vmem:[%s322 + $0x64] sm:$0xf]
        %v349 = vld [vmem:[%s322 + $0x68] sm:$0xf]
        %v350 = vld [vmem:[%s322 + $0x6c] sm:$0xf]
        %v351 = vld [vmem:[%s322 + $0x70] sm:$0xf]
        %v352 = vld [vmem:[%s322 + $0x74] sm:$0xf]
        %v353 = vld [vmem:[%s322 + $0x78] sm:$0xf]
        %v354 = vld [vmem:[%s322 + $0x7c] sm:$0xf]
        %v363 = vunpack.c.l.b16 %v314
        %v364 = vunpack.c.h.b16 %v314
        %v365 = vunpack.c.l.b16 %v315
        %v366 = vunpack.c.h.b16 %v315
        %v367 = vunpack.c.l.b16 %v316
        %v368 = vunpack.c.h.b16 %v316
        %v369 = vunpack.c.l.b16 %v317
        %v370 = vunpack.c.h.b16 %v317
        %v371 = vunpack.c.l.b16 %v318
        %v372 = vunpack.c.h.b16 %v318
        %v373 = vunpack.c.l.b16 %v319
        %v374 = vunpack.c.h.b16 %v319
        %v375 = vunpack.c.l.b16 %v320
        %v376 = vunpack.c.h.b16 %v320
        %v377 = vunpack.c.l.b16 %v321
        %v378 = vunpack.c.h.b16 %v321
        %v379 = vpack.c.b16 %v365, %v363
        %v380 = vpack.c.b16 %v366, %v364
        %v381 = vpack.c.b16 %v369, %v367
        %v382 = vpack.c.b16 %v370, %v368
        %v383 = vpack.c.b16 %v373, %v371
        %v384 = vpack.c.b16 %v374, %v372
        %v385 = vpack.c.b16 %v377, %v375
        %v386 = vpack.c.b16 %v378, %v376
        %v427 = vunpack.c.l.b16 %v323
        %v428 = vunpack.c.l.b16 %v324
        %v429 = vunpack.c.l.b16 %v325
        %v430 = vunpack.c.l.b16 %v326
        %v431 = vunpack.c.l.b16 %v327
        %v432 = vunpack.c.l.b16 %v328
        %v433 = vunpack.c.l.b16 %v329
        %v434 = vunpack.c.l.b16 %v330
        %v435 = vunpack.c.l.b16 %v331
        %v436 = vunpack.c.l.b16 %v332
        %v437 = vunpack.c.l.b16 %v333
        %v438 = vunpack.c.l.b16 %v334
        %v439 = vunpack.c.l.b16 %v335
        %v440 = vunpack.c.l.b16 %v336
        %v441 = vunpack.c.l.b16 %v337
        %v442 = vunpack.c.l.b16 %v338
        %v443 = vunpack.c.l.b16 %v339
        %v444 = vunpack.c.l.b16 %v340
        %v445 = vunpack.c.l.b16 %v341
        %v446 = vunpack.c.l.b16 %v342
        %v447 = vunpack.c.l.b16 %v343
        %v448 = vunpack.c.l.b16 %v344
        %v449 = vunpack.c.l.b16 %v345
        %v450 = vunpack.c.l.b16 %v346
        %v451 = vunpack.c.l.b16 %v347
        %v452 = vunpack.c.l.b16 %v348
        %v453 = vunpack.c.l.b16 %v349
        %v454 = vunpack.c.l.b16 %v350
        %v455 = vunpack.c.l.b16 %v351
        %v456 = vunpack.c.l.b16 %v352
        %v457 = vunpack.c.l.b16 %v353
        %v458 = vunpack.c.l.b16 %v354
        %v459 = vpack.c.b16 %v428, %v427
        %v460 = vpack.c.b16 %v430, %v429
        %v461 = vpack.c.b16 %v432, %v431
        %v462 = vpack.c.b16 %v434, %v433
        %v463 = vpack.c.b16 %v436, %v435
        %v464 = vpack.c.b16 %v438, %v437
        %v465 = vpack.c.b16 %v440, %v439
        %v466 = vpack.c.b16 %v442, %v441
        %v467 = vpack.c.b16 %v444, %v443
        %v468 = vpack.c.b16 %v446, %v445
        %v469 = vpack.c.b16 %v448, %v447
        %v470 = vpack.c.b16 %v450, %v449
        %v471 = vpack.c.b16 %v452, %v451
        %v472 = vpack.c.b16 %v454, %v453
        %v473 = vpack.c.b16 %v456, %v455
        %v474 = vpack.c.b16 %v458, %v457
        %491 = vmatprep.subr.bf16.mxu0 0
        %492 = vmatpush1.bf16.msra.mxu0 %v459
        %493 = vmatprep.subr.bf16.mxu0 0
        %494 = vmatpush1.bf16.msra.mxu0 %v460
        %495 = vmatprep.subr.bf16.mxu0 0
        %496 = vmatpush1.bf16.msra.mxu0 %v461
        %497 = vmatprep.subr.bf16.mxu0 0
        %498 = vmatpush1.bf16.msra.mxu0 %v462
        %499 = vmatprep.subr.bf16.mxu0 0
        %500 = vmatpush1.bf16.msra.mxu0 %v463
        %501 = vmatprep.subr.bf16.mxu0 0
        %502 = vmatpush1.bf16.msra.mxu0 %v464
        %503 = vmatprep.subr.bf16.mxu0 0
        %504 = vmatpush1.bf16.msra.mxu0 %v465
        %505 = vmatprep.subr.bf16.mxu0 0
        %506 = vmatpush1.bf16.msra.mxu0 %v466
        %507 = vmatprep.subr.bf16.mxu0 0
        %508 = vmatpush1.bf16.msra.mxu0 %v467
        %509 = vmatprep.subr.bf16.mxu0 0
        %510 = vmatpush1.bf16.msra.mxu0 %v468
        %511 = vmatprep.subr.bf16.mxu0 0
        %512 = vmatpush1.bf16.msra.mxu0 %v469
        %513 = vmatprep.subr.bf16.mxu0 0
        %514 = vmatpush1.bf16.msra.mxu0 %v470
        %515 = vmatprep.subr.bf16.mxu0 0
        %516 = vmatpush1.bf16.msra.mxu0 %v471
        %517 = vmatprep.subr.bf16.mxu0 0
        %518 = vmatpush1.bf16.msra.mxu0 %v472
        %519 = vmatprep.subr.bf16.mxu0 0
        %520 = vmatpush1.bf16.msra.mxu0 %v473
        %521 = vmatprep.subr.bf16.mxu0 0
        %522 = vmatpush1.bf16.msra.mxu0 %v474
        %523 = vmatprep.mubr.bf16.mxu0 %v380
        %524 = vmatmul.mubr.bf16.gmra.mrb[0].mxu0 %v379
        %v525 = vpop.f32.mrb[0].mxu0
        %v526 = vadd.f32 0.0, %v525
        %v527 = vpop.f32.mrb[0].mxu0
        %v528 = vpop.f32.mrb[0].mxu0
        %v529 = vadd.f32 0.0, %v528
        %v530 = vpop.f32.mrb[0].mxu0
        %531 = vmatprep.mubr.bf16.mxu0 %v382
        %532 = vmatmul.mubr.bf16.gmra.mrb[0].mxu0 %v381
        %v533 = vpop.f32.mrb[0].mxu0
        %v534 = vadd.f32 0.0, %v533
        %v535 = vpop.f32.mrb[0].mxu0
        %v536 = vpop.f32.mrb[0].mxu0
        %v537 = vadd.f32 0.0, %v536
        %v538 = vpop.f32.mrb[0].mxu0
        %539 = vmatprep.mubr.bf16.mxu0 %v384
        %540 = vmatmul.mubr.bf16.gmra.mrb[0].mxu0 %v383
        %v541 = vpop.f32.mrb[0].mxu0
        %v542 = vadd.f32 0.0, %v541
        %v543 = vpop.f32.mrb[0].mxu0
        %v544 = vpop.f32.mrb[0].mxu0
        %v545 = vadd.f32 0.0, %v544
        %v546 = vpop.f32.mrb[0].mxu0
        %547 = vmatprep.mubr.bf16.mxu0 %v386
        %548 = vmatmul.mubr.bf16.gmra.mrb[0].mxu0 %v385
        %v549 = vpop.f32.mrb[0].mxu0
        %v550 = vadd.f32 0.0, %v549
        %v551 = vpop.f32.mrb[0].mxu0
        %v552 = vpop.f32.mrb[0].mxu0
        %v553 = vadd.f32 0.0, %v552
        %v554 = vpop.f32.mrb[0].mxu0
        %555 = vdwg.mxu0
        %v564 = vunpack.c.l.b16 %v273
        %v565 = vunpack.c.h.b16 %v273
        %v566 = vunpack.c.l.b16 %v274
        %v567 = vunpack.c.h.b16 %v274
        %v568 = vunpack.c.l.b16 %v275
        %v569 = vunpack.c.h.b16 %v275
        %v570 = vunpack.c.l.b16 %v276
        %v571 = vunpack.c.h.b16 %v276
        %v572 = vunpack.c.l.b16 %v277
        %v573 = vunpack.c.h.b16 %v277
        %v574 = vunpack.c.l.b16 %v278
        %v575 = vunpack.c.h.b16 %v278
        %v576 = vunpack.c.l.b16 %v279
        %v577 = vunpack.c.h.b16 %v279
        %v578 = vunpack.c.l.b16 %v280
        %v579 = vunpack.c.h.b16 %v280
        %v580 = vpack.c.b16 %v566, %v564
        %v581 = vpack.c.b16 %v567, %v565
        %v582 = vpack.c.b16 %v570, %v568
        %v583 = vpack.c.b16 %v571, %v569
        %v584 = vpack.c.b16 %v574, %v572
        %v585 = vpack.c.b16 %v575, %v573
        %v586 = vpack.c.b16 %v578, %v576
        %v587 = vpack.c.b16 %v579, %v577
        %v628 = vunpack.c.l.b16 %v281
        %v629 = vunpack.c.l.b16 %v282
        %v630 = vunpack.c.l.b16 %v283
        %v631 = vunpack.c.l.b16 %v284
        %v632 = vunpack.c.l.b16 %v285
        %v633 = vunpack.c.l.b16 %v286
        %v634 = vunpack.c.l.b16 %v287
        %v635 = vunpack.c.l.b16 %v288
        %v636 = vunpack.c.l.b16 %v289
        %v637 = vunpack.c.l.b16 %v290
        %v638 = vunpack.c.l.b16 %v291
        %v639 = vunpack.c.l.b16 %v292
        %v640 = vunpack.c.l.b16 %v293
        %v641 = vunpack.c.l.b16 %v294
        %v642 = vunpack.c.l.b16 %v295
        %v643 = vunpack.c.l.b16 %v296
        %v644 = vunpack.c.l.b16 %v297
        %v645 = vunpack.c.l.b16 %v298
        %v646 = vunpack.c.l.b16 %v299
        %v647 = vunpack.c.l.b16 %v300
        %v648 = vunpack.c.l.b16 %v301
        %v649 = vunpack.c.l.b16 %v302
        %v650 = vunpack.c.l.b16 %v303
        %v651 = vunpack.c.l.b16 %v304
        %v652 = vunpack.c.l.b16 %v305
        %v653 = vunpack.c.l.b16 %v306
        %v654 = vunpack.c.l.b16 %v307
        %v655 = vunpack.c.l.b16 %v308
        %v656 = vunpack.c.l.b16 %v309
        %v657 = vunpack.c.l.b16 %v310
        %v658 = vunpack.c.l.b16 %v311
        %v659 = vunpack.c.l.b16 %v312
        %v660 = vpack.c.b16 %v629, %v628
        %v661 = vpack.c.b16 %v631, %v630
        %v662 = vpack.c.b16 %v633, %v632
        %v663 = vpack.c.b16 %v635, %v634
        %v664 = vpack.c.b16 %v637, %v636
        %v665 = vpack.c.b16 %v639, %v638
        %v666 = vpack.c.b16 %v641, %v640
        %v667 = vpack.c.b16 %v643, %v642
        %v668 = vpack.c.b16 %v645, %v644
        %v669 = vpack.c.b16 %v647, %v646
        %v670 = vpack.c.b16 %v649, %v648
        %v671 = vpack.c.b16 %v651, %v650
        %v672 = vpack.c.b16 %v653, %v652
        %v673 = vpack.c.b16 %v655, %v654
        %v674 = vpack.c.b16 %v657, %v656
        %v675 = vpack.c.b16 %v659, %v658
        %692 = vmatprep.subr.bf16.mxu0 0
        %693 = vmatpush1.bf16.msra.mxu0 %v660
        %694 = vmatprep.subr.bf16.mxu0 0
        %695 = vmatpush1.bf16.msra.mxu0 %v661
        %696 = vmatprep.subr.bf16.mxu0 0
        %697 = vmatpush1.bf16.msra.mxu0 %v662
        %698 = vmatprep.subr.bf16.mxu0 0
        %699 = vmatpush1.bf16.msra.mxu0 %v663
        %700 = vmatprep.subr.bf16.mxu0 0
        %701 = vmatpush1.bf16.msra.mxu0 %v664
        %702 = vmatprep.subr.bf16.mxu0 0
        %703 = vmatpush1.bf16.msra.mxu0 %v665
        %704 = vmatprep.subr.bf16.mxu0 0
        %705 = vmatpush1.bf16.msra.mxu0 %v666
        %706 = vmatprep.subr.bf16.mxu0 0
        %707 = vmatpush1.bf16.msra.mxu0 %v667
        %708 = vmatprep.subr.bf16.mxu0 0
        %709 = vmatpush1.bf16.msra.mxu0 %v668
        %710 = vmatprep.subr.bf16.mxu0 0
        %711 = vmatpush1.bf16.msra.mxu0 %v669
        %712 = vmatprep.subr.bf16.mxu0 0
        %713 = vmatpush1.bf16.msra.mxu0 %v670
        %714 = vmatprep.subr.bf16.mxu0 0
        %715 = vmatpush1.bf16.msra.mxu0 %v671
        %716 = vmatprep.subr.bf16.mxu0 0
        %717 = vmatpush1.bf16.msra.mxu0 %v672
        %718 = vmatprep.subr.bf16.mxu0 0
        %719 = vmatpush1.bf16.msra.mxu0 %v673
        %720 = vmatprep.subr.bf16.mxu0 0
        %721 = vmatpush1.bf16.msra.mxu0 %v674
        %722 = vmatprep.subr.bf16.mxu0 0
        %723 = vmatpush1.bf16.msra.mxu0 %v675
        %724 = vmatprep.mubr.bf16.mxu0 %v581
        %725 = vmatmul.mubr.bf16.gmra.mrb[0].mxu0 %v580
        %v726 = vpop.f32.mrb[0].mxu0
        %v727 = vadd.f32 %v526, %v726
        %v728 = vpop.f32.mrb[0].mxu0
        %v729 = vpop.f32.mrb[0].mxu0
        %v730 = vadd.f32 %v529, %v729
        %v731 = vpop.f32.mrb[0].mxu0
        %732 = vmatprep.mubr.bf16.mxu0 %v583
        %733 = vmatmul.mubr.bf16.gmra.mrb[0].mxu0 %v582
        %v734 = vpop.f32.mrb[0].mxu0
        %v735 = vadd.f32 %v534, %v734
        %v736 = vpop.f32.mrb[0].mxu0
        %v737 = vpop.f32.mrb[0].mxu0
        %v738 = vadd.f32 %v537, %v737
        %v739 = vpop.f32.mrb[0].mxu0
        %740 = vmatprep.mubr.bf16.mxu0 %v585
        %741 = vmatmul.mubr.bf16.gmra.mrb[0].mxu0 %v584
        %v742 = vpop.f32.mrb[0].mxu0
        %v743 = vadd.f32 %v542, %v742
        %v744 = vpop.f32.mrb[0].mxu0
        %v745 = vpop.f32.mrb[0].mxu0
        %v746 = vadd.f32 %v545, %v745
        %v747 = vpop.f32.mrb[0].mxu0
        %748 = vmatprep.mubr.bf16.mxu0 %v587
        %749 = vmatmul.mubr.bf16.gmra.mrb[0].mxu0 %v586
        %v750 = vpop.f32.mrb[0].mxu0
        %v751 = vadd.f32 %v550, %v750
        %v752 = vpop.f32.mrb[0].mxu0
        %v753 = vpop.f32.mrb[0].mxu0
        %v754 = vadd.f32 %v553, %v753
        %v755 = vpop.f32.mrb[0].mxu0
        %756 = vdwg.mxu0
        %s757 = scalar_lea.vmem %s237, 16 [#allocation2]
        %v758 = vld [vmem:[%s757] sm:$0xff]
        %v759 = vld [vmem:[%s757 + $0x8] sm:$0xff]
        %v760 = vld [vmem:[%s757 + $0x10] sm:$0xff]
        %v761 = vld [vmem:[%s757 + $0x18] sm:$0xff]
        %v762 = vld [vmem:[%s757 + $0x20] sm:$0xff]
        %v763 = vld [vmem:[%s757 + $0x28] sm:$0xff]
        %v764 = vld [vmem:[%s757 + $0x30] sm:$0xff]
        %v765 = vld [vmem:[%s757 + $0x38] sm:$0xff]
        %s766 = scalar_lea.vmem [#allocation5], 256
        %v767 = vld [vmem:[%s766] sm:$0xf]
        %v768 = vld [vmem:[%s766 + $0x4] sm:$0xf]
        %v769 = vld [vmem:[%s766 + $0x8] sm:$0xf]
        %v770 = vld [vmem:[%s766 + $0xc] sm:$0xf]
        %v771 = vld [vmem:[%s766 + $0x10] sm:$0xf]
        %v772 = vld [vmem:[%s766 + $0x14] sm:$0xf]
        %v773 = vld [vmem:[%s766 + $0x18] sm:$0xf]
        %v774 = vld [vmem:[%s766 + $0x1c] sm:$0xf]
        %v775 = vld [vmem:[%s766 + $0x20] sm:$0xf]
        %v776 = vld [vmem:[%s766 + $0x24] sm:$0xf]
        %v777 = vld [vmem:[%s766 + $0x28] sm:$0xf]
        %v778 = vld [vmem:[%s766 + $0x2c] sm:$0xf]
        %v779 = vld [vmem:[%s766 + $0x30] sm:$0xf]
        %v780 = vld [vmem:[%s766 + $0x34] sm:$0xf]
        %v781 = vld [vmem:[%s766 + $0x38] sm:$0xf]
        %v782 = vld [vmem:[%s766 + $0x3c] sm:$0xf]
        %v783 = vld [vmem:[%s766 + $0x40] sm:$0xf]
        %v784 = vld [vmem:[%s766 + $0x44] sm:$0xf]
        %v785 = vld [vmem:[%s766 + $0x48] sm:$0xf]
        %v786 = vld [vmem:[%s766 + $0x4c] sm:$0xf]
        %v787 = vld [vmem:[%s766 + $0x50] sm:$0xf]
        %v788 = vld [vmem:[%s766 + $0x54] sm:$0xf]
        %v789 = vld [vmem:[%s766 + $0x58] sm:$0xf]
        %v790 = vld [vmem:[%s766 + $0x5c] sm:$0xf]
        %v791 = vld [vmem:[%s766 + $0x60] sm:$0xf]
        %v792 = vld [vmem:[%s766 + $0x64] sm:$0xf]
        %v793 = vld [vmem:[%s766 + $0x68] sm:$0xf]
        %v794 = vld [vmem:[%s766 + $0x6c] sm:$0xf]
        %v795 = vld [vmem:[%s766 + $0x70] sm:$0xf]
        %v796 = vld [vmem:[%s766 + $0x74] sm:$0xf]
        %v797 = vld [vmem:[%s766 + $0x78] sm:$0xf]
        %v798 = vld [vmem:[%s766 + $0x7c] sm:$0xf]
        %v807 = vunpack.c.l.b16 %v758
        %v808 = vunpack.c.h.b16 %v758
        %v809 = vunpack.c.l.b16 %v759
        %v810 = vunpack.c.h.b16 %v759
        %v811 = vunpack.c.l.b16 %v760
        %v812 = vunpack.c.h.b16 %v760
        %v813 = vunpack.c.l.b16 %v761
        %v814 = vunpack.c.h.b16 %v761
        %v815 = vunpack.c.l.b16 %v762
        %v816 = vunpack.c.h.b16 %v762
        %v817 = vunpack.c.l.b16 %v763
        %v818 = vunpack.c.h.b16 %v763
        %v819 = vunpack.c.l.b16 %v764
        %v820 = vunpack.c.h.b16 %v764
        %v821 = vunpack.c.l.b16 %v765
        %v822 = vunpack.c.h.b16 %v765
        %v823 = vpack.c.b16 %v809, %v807
        %v824 = vpack.c.b16 %v810, %v808
        %v825 = vpack.c.b16 %v813, %v811
        %v826 = vpack.c.b16 %v814, %v812
        %v827 = vpack.c.b16 %v817, %v815
        %v828 = vpack.c.b16 %v818, %v816
        %v829 = vpack.c.b16 %v821, %v819
        %v830 = vpack.c.b16 %v822, %v820
        %v871 = vunpack.c.l.b16 %v767
        %v872 = vunpack.c.l.b16 %v768
        %v873 = vunpack.c.l.b16 %v769
        %v874 = vunpack.c.l.b16 %v770
        %v875 = vunpack.c.l.b16 %v771
        %v876 = vunpack.c.l.b16 %v772
        %v877 = vunpack.c.l.b16 %v773
        %v878 = vunpack.c.l.b16 %v774
        %v879 = vunpack.c.l.b16 %v775
        %v880 = vunpack.c.l.b16 %v776
        %v881 = vunpack.c.l.b16 %v777
        %v882 = vunpack.c.l.b16 %v778
        %v883 = vunpack.c.l.b16 %v779
        %v884 = vunpack.c.l.b16 %v780
        %v885 = vunpack.c.l.b16 %v781
        %v886 = vunpack.c.l.b16 %v782
        %v887 = vunpack.c.l.b16 %v783
        %v888 = vunpack.c.l.b16 %v784
        %v889 = vunpack.c.l.b16 %v785
        %v890 = vunpack.c.l.b16 %v786
        %v891 = vunpack.c.l.b16 %v787
        %v892 = vunpack.c.l.b16 %v788
        %v893 = vunpack.c.l.b16 %v789
        %v894 = vunpack.c.l.b16 %v790
        %v895 = vunpack.c.l.b16 %v791
        %v896 = vunpack.c.l.b16 %v792
        %v897 = vunpack.c.l.b16 %v793
        %v898 = vunpack.c.l.b16 %v794
        %v899 = vunpack.c.l.b16 %v795
        %v900 = vunpack.c.l.b16 %v796
        %v901 = vunpack.c.l.b16 %v797
        %v902 = vunpack.c.l.b16 %v798
        %v903 = vpack.c.b16 %v872, %v871
        %v904 = vpack.c.b16 %v874, %v873
        %v905 = vpack.c.b16 %v876, %v875
        %v906 = vpack.c.b16 %v878, %v877
        %v907 = vpack.c.b16 %v880, %v879
        %v908 = vpack.c.b16 %v882, %v881
        %v909 = vpack.c.b16 %v884, %v883
        %v910 = vpack.c.b16 %v886, %v885
        %v911 = vpack.c.b16 %v888, %v887
        %v912 = vpack.c.b16 %v890, %v889
        %v913 = vpack.c.b16 %v892, %v891
        %v914 = vpack.c.b16 %v894, %v893
        %v915 = vpack.c.b16 %v896, %v895
        %v916 = vpack.c.b16 %v898, %v897
        %v917 = vpack.c.b16 %v900, %v899
        %v918 = vpack.c.b16 %v902, %v901
        %935 = vmatprep.subr.bf16.mxu0 0
        %936 = vmatpush1.bf16.msra.mxu0 %v903
        %937 = vmatprep.subr.bf16.mxu0 0
        %938 = vmatpush1.bf16.msra.mxu0 %v904
        %939 = vmatprep.subr.bf16.mxu0 0
        %940 = vmatpush1.bf16.msra.mxu0 %v905
        %941 = vmatprep.subr.bf16.mxu0 0
        %942 = vmatpush1.bf16.msra.mxu0 %v906
        %943 = vmatprep.subr.bf16.mxu0 0
        %944 = vmatpush1.bf16.msra.mxu0 %v907
        %945 = vmatprep.subr.bf16.mxu0 0
        %946 = vmatpush1.bf16.msra.mxu0 %v908
        %947 = vmatprep.subr.bf16.mxu0 0
        %948 = vmatpush1.bf16.msra.mxu0 %v909
        %949 = vmatprep.subr.bf16.mxu0 0
        %950 = vmatpush1.bf16.msra.mxu0 %v910
        %951 = vmatprep.subr.bf16.mxu0 0
        %952 = vmatpush1.bf16.msra.mxu0 %v911
        %953 = vmatprep.subr.bf16.mxu0 0
        %954 = vmatpush1.bf16.msra.mxu0 %v912
        %955 = vmatprep.subr.bf16.mxu0 0
        %956 = vmatpush1.bf16.msra.mxu0 %v913
        %957 = vmatprep.subr.bf16.mxu0 0
        %958 = vmatpush1.bf16.msra.mxu0 %v914
        %959 = vmatprep.subr.bf16.mxu0 0
        %960 = vmatpush1.bf16.msra.mxu0 %v915
        %961 = vmatprep.subr.bf16.mxu0 0
        %962 = vmatpush1.bf16.msra.mxu0 %v916
        %963 = vmatprep.subr.bf16.mxu0 0
        %964 = vmatpush1.bf16.msra.mxu0 %v917
        %965 = vmatprep.subr.bf16.mxu0 0
        %966 = vmatpush1.bf16.msra.mxu0 %v918
        %967 = vmatprep.mubr.bf16.mxu0 %v824
        %968 = vmatmul.mubr.bf16.gmra.mrb[0].mxu0 %v823
        %v969 = vpop.f32.mrb[0].mxu0
        %v970 = vadd.f32 0.0, %v969
        %v971 = vpop.f32.mrb[0].mxu0
        %v972 = vpop.f32.mrb[0].mxu0
        %v973 = vadd.f32 0.0, %v972
        %v974 = vpop.f32.mrb[0].mxu0
        %975 = vmatprep.mubr.bf16.mxu0 %v826
        %976 = vmatmul.mubr.bf16.gmra.mrb[0].mxu0 %v825
        %v977 = vpop.f32.mrb[0].mxu0
        %v978 = vadd.f32 0.0, %v977
        %v979 = vpop.f32.mrb[0].mxu0
        %v980 = vpop.f32.mrb[0].mxu0
        %v981 = vadd.f32 0.0, %v980
        %v982 = vpop.f32.mrb[0].mxu0
        %983 = vmatprep.mubr.bf16.mxu0 %v828
        %984 = vmatmul.mubr.bf16.gmra.mrb[0].mxu0 %v827
        %v985 = vpop.f32.mrb[0].mxu0
        %v986 = vadd.f32 0.0, %v985
        %v987 = vpop.f32.mrb[0].mxu0
        %v988 = vpop.f32.mrb[0].mxu0
        %v989 = vadd.f32 0.0, %v988
        %v990 = vpop.f32.mrb[0].mxu0
        %991 = vmatprep.mubr.bf16.mxu0 %v830
        %992 = vmatmul.mubr.bf16.gmra.mrb[0].mxu0 %v829
        %v993 = vpop.f32.mrb[0].mxu0
        %v994 = vadd.f32 0.0, %v993
        %v995 = vpop.f32.mrb[0].mxu0
        %v996 = vpop.f32.mrb[0].mxu0
        %v997 = vadd.f32 0.0, %v996
        %v998 = vpop.f32.mrb[0].mxu0
        %999 = vdwg.mxu0
        %v1000 = vadd.f32 %v727, %v970
        %v1001 = vadd.f32 %v730, %v973
        %v1002 = vadd.f32 %v735, %v978
        %v1003 = vadd.f32 %v738, %v981
        %v1004 = vadd.f32 %v743, %v986
        %v1005 = vadd.f32 %v746, %v989
        %v1006 = vadd.f32 %v751, %v994
        %v1007 = vadd.f32 %v754, %v997
        %s1008 = scalar_lea.vmem %s237, 24 [#allocation2]
        %v1009 = vld [vmem:[%s1008] sm:$0xff]
        %v1010 = vld [vmem:[%s1008 + $0x8] sm:$0xff]
        %v1011 = vld [vmem:[%s1008 + $0x10] sm:$0xff]
        %v1012 = vld [vmem:[%s1008 + $0x18] sm:$0xff]
        %v1013 = vld [vmem:[%s1008 + $0x20] sm:$0xff]
        %v1014 = vld [vmem:[%s1008 + $0x28] sm:$0xff]
        %v1015 = vld [vmem:[%s1008 + $0x30] sm:$0xff]
        %v1016 = vld [vmem:[%s1008 + $0x38] sm:$0xff]
        %s1017 = scalar_lea.vmem [#allocation5], 384
        %v1018 = vld [vmem:[%s1017] sm:$0xf]
        %v1019 = vld [vmem:[%s1017 + $0x4] sm:$0xf]
        %v1020 = vld [vmem:[%s1017 + $0x8] sm:$0xf]
        %v1021 = vld [vmem:[%s1017 + $0xc] sm:$0xf]
        %v1022 = vld [vmem:[%s1017 + $0x10] sm:$0xf]
        %v1023 = vld [vmem:[%s1017 + $0x14] sm:$0xf]
        %v1024 = vld [vmem:[%s1017 + $0x18] sm:$0xf]
        %v1025 = vld [vmem:[%s1017 + $0x1c] sm:$0xf]
        %v1026 = vld [vmem:[%s1017 + $0x20] sm:$0xf]
        %v1027 = vld [vmem:[%s1017 + $0x24] sm:$0xf]
        %v1028 = vld [vmem:[%s1017 + $0x28] sm:$0xf]
        %v1029 = vld [vmem:[%s1017 + $0x2c] sm:$0xf]
        %v1030 = vld [vmem:[%s1017 + $0x30] sm:$0xf]
        %v1031 = vld [vmem:[%s1017 + $0x34] sm:$0xf]
        %v1032 = vld [vmem:[%s1017 + $0x38] sm:$0xf]
        %v1033 = vld [vmem:[%s1017 + $0x3c] sm:$0xf]
        %v1034 = vld [vmem:[%s1017 + $0x40] sm:$0xf]
        %v1035 = vld [vmem:[%s1017 + $0x44] sm:$0xf]
        %v1036 = vld [vmem:[%s1017 + $0x48] sm:$0xf]
        %v1037 = vld [vmem:[%s1017 + $0x4c] sm:$0xf]
        %v1038 = vld [vmem:[%s1017 + $0x50] sm:$0xf]
        %v1039 = vld [vmem:[%s1017 + $0x54] sm:$0xf]
        %v1040 = vld [vmem:[%s1017 + $0x58] sm:$0xf]
        %v1041 = vld [vmem:[%s1017 + $0x5c] sm:$0xf]
        %v1042 = vld [vmem:[%s1017 + $0x60] sm:$0xf]
        %v1043 = vld [vmem:[%s1017 + $0x64] sm:$0xf]
        %v1044 = vld [vmem:[%s1017 + $0x68] sm:$0xf]
        %v1045 = vld [vmem:[%s1017 + $0x6c] sm:$0xf]
        %v1046 = vld [vmem:[%s1017 + $0x70] sm:$0xf]
        %v1047 = vld [vmem:[%s1017 + $0x74] sm:$0xf]
        %v1048 = vld [vmem:[%s1017 + $0x78] sm:$0xf]
        %v1049 = vld [vmem:[%s1017 + $0x7c] sm:$0xf]
        %v1058 = vunpack.c.l.b16 %v1009
        %v1059 = vunpack.c.h.b16 %v1009
        %v1060 = vunpack.c.l.b16 %v1010
        %v1061 = vunpack.c.h.b16 %v1010
        %v1062 = vunpack.c.l.b16 %v1011
        %v1063 = vunpack.c.h.b16 %v1011
        %v1064 = vunpack.c.l.b16 %v1012
        %v1065 = vunpack.c.h.b16 %v1012
        %v1066 = vunpack.c.l.b16 %v1013
        %v1067 = vunpack.c.h.b16 %v1013
        %v1068 = vunpack.c.l.b16 %v1014
        %v1069 = vunpack.c.h.b16 %v1014
        %v1070 = vunpack.c.l.b16 %v1015
        %v1071 = vunpack.c.h.b16 %v1015
        %v1072 = vunpack.c.l.b16 %v1016
        %v1073 = vunpack.c.h.b16 %v1016
        %v1074 = vpack.c.b16 %v1060, %v1058
        %v1075 = vpack.c.b16 %v1061, %v1059
        %v1076 = vpack.c.b16 %v1064, %v1062
        %v1077 = vpack.c.b16 %v1065, %v1063
        %v1078 = vpack.c.b16 %v1068, %v1066
        %v1079 = vpack.c.b16 %v1069, %v1067
        %v1080 = vpack.c.b16 %v1072, %v1070
        %v1081 = vpack.c.b16 %v1073, %v1071
        %v1122 = vunpack.c.l.b16 %v1018
        %v1123 = vunpack.c.l.b16 %v1019
        %v1124 = vunpack.c.l.b16 %v1020
        %v1125 = vunpack.c.l.b16 %v1021
        %v1126 = vunpack.c.l.b16 %v1022
        %v1127 = vunpack.c.l.b16 %v1023
        %v1128 = vunpack.c.l.b16 %v1024
        %v1129 = vunpack.c.l.b16 %v1025
        %v1130 = vunpack.c.l.b16 %v1026
        %v1131 = vunpack.c.l.b16 %v1027
        %v1132 = vunpack.c.l.b16 %v1028
        %v1133 = vunpack.c.l.b16 %v1029
        %v1134 = vunpack.c.l.b16 %v1030
        %v1135 = vunpack.c.l.b16 %v1031
        %v1136 = vunpack.c.l.b16 %v1032
        %v1137 = vunpack.c.l.b16 %v1033
        %v1138 = vunpack.c.l.b16 %v1034
        %v1139 = vunpack.c.l.b16 %v1035
        %v1140 = vunpack.c.l.b16 %v1036
        %v1141 = vunpack.c.l.b16 %v1037
        %v1142 = vunpack.c.l.b16 %v1038
        %v1143 = vunpack.c.l.b16 %v1039
        %v1144 = vunpack.c.l.b16 %v1040
        %v1145 = vunpack.c.l.b16 %v1041
        %v1146 = vunpack.c.l.b16 %v1042
        %v1147 = vunpack.c.l.b16 %v1043
        %v1148 = vunpack.c.l.b16 %v1044
        %v1149 = vunpack.c.l.b16 %v1045
        %v1150 = vunpack.c.l.b16 %v1046
        %v1151 = vunpack.c.l.b16 %v1047
        %v1152 = vunpack.c.l.b16 %v1048
        %v1153 = vunpack.c.l.b16 %v1049
        %v1154 = vpack.c.b16 %v1123, %v1122
        %v1155 = vpack.c.b16 %v1125, %v1124
        %v1156 = vpack.c.b16 %v1127, %v1126
        %v1157 = vpack.c.b16 %v1129, %v1128
        %v1158 = vpack.c.b16 %v1131, %v1130
        %v1159 = vpack.c.b16 %v1133, %v1132
        %v1160 = vpack.c.b16 %v1135, %v1134
        %v1161 = vpack.c.b16 %v1137, %v1136
        %v1162 = vpack.c.b16 %v1139, %v1138
        %v1163 = vpack.c.b16 %v1141, %v1140
        %v1164 = vpack.c.b16 %v1143, %v1142
        %v1165 = vpack.c.b16 %v1145, %v1144
        %v1166 = vpack.c.b16 %v1147, %v1146
        %v1167 = vpack.c.b16 %v1149, %v1148
        %v1168 = vpack.c.b16 %v1151, %v1150
        %v1169 = vpack.c.b16 %v1153, %v1152
        %1186 = vmatprep.subr.bf16.mxu0 0
        %1187 = vmatpush1.bf16.msra.mxu0 %v1154
        %1188 = vmatprep.subr.bf16.mxu0 0
        %1189 = vmatpush1.bf16.msra.mxu0 %v1155
        %1190 = vmatprep.subr.bf16.mxu0 0
        %1191 = vmatpush1.bf16.msra.mxu0 %v1156
        %1192 = vmatprep.subr.bf16.mxu0 0
        %1193 = vmatpush1.bf16.msra.mxu0 %v1157
        %1194 = vmatprep.subr.bf16.mxu0 0
        %1195 = vmatpush1.bf16.msra.mxu0 %v1158
        %1196 = vmatprep.subr.bf16.mxu0 0
        %1197 = vmatpush1.bf16.msra.mxu0 %v1159
        %1198 = vmatprep.subr.bf16.mxu0 0
        %1199 = vmatpush1.bf16.msra.mxu0 %v1160
        %1200 = vmatprep.subr.bf16.mxu0 0
        %1201 = vmatpush1.bf16.msra.mxu0 %v1161
        %1202 = vmatprep.subr.bf16.mxu0 0
        %1203 = vmatpush1.bf16.msra.mxu0 %v1162
        %1204 = vmatprep.subr.bf16.mxu0 0
        %1205 = vmatpush1.bf16.msra.mxu0 %v1163
        %1206 = vmatprep.subr.bf16.mxu0 0
        %1207 = vmatpush1.bf16.msra.mxu0 %v1164
        %1208 = vmatprep.subr.bf16.mxu0 0
        %1209 = vmatpush1.bf16.msra.mxu0 %v1165
        %1210 = vmatprep.subr.bf16.mxu0 0
        %1211 = vmatpush1.bf16.msra.mxu0 %v1166
        %1212 = vmatprep.subr.bf16.mxu0 0
        %1213 = vmatpush1.bf16.msra.mxu0 %v1167
        %1214 = vmatprep.subr.bf16.mxu0 0
        %1215 = vmatpush1.bf16.msra.mxu0 %v1168
        %1216 = vmatprep.subr.bf16.mxu0 0
        %1217 = vmatpush1.bf16.msra.mxu0 %v1169
        %1218 = vmatprep.mubr.bf16.mxu0 %v1075
        %1219 = vmatmul.mubr.bf16.gmra.mrb[0].mxu0 %v1074
        %v1220 = vpop.f32.mrb[0].mxu0
        %v1221 = vadd.f32 0.0, %v1220
        %v1222 = vpop.f32.mrb[0].mxu0
        %v1223 = vpop.f32.mrb[0].mxu0
        %v1224 = vadd.f32 0.0, %v1223
        %v1225 = vpop.f32.mrb[0].mxu0
        %1226 = vmatprep.mubr.bf16.mxu0 %v1077
        %1227 = vmatmul.mubr.bf16.gmra.mrb[0].mxu0 %v1076
        %v1228 = vpop.f32.mrb[0].mxu0
        %v1229 = vadd.f32 0.0, %v1228
        %v1230 = vpop.f32.mrb[0].mxu0
        %v1231 = vpop.f32.mrb[0].mxu0
        %v1232 = vadd.f32 0.0, %v1231
        %v1233 = vpop.f32.mrb[0].mxu0
        %1234 = vmatprep.mubr.bf16.mxu0 %v1079
        %1235 = vmatmul.mubr.bf16.gmra.mrb[0].mxu0 %v1078
        %v1236 = vpop.f32.mrb[0].mxu0
        %v1237 = vadd.f32 0.0, %v1236
        %v1238 = vpop.f32.mrb[0].mxu0
        %v1239 = vpop.f32.mrb[0].mxu0
        %v1240 = vadd.f32 0.0, %v1239
        %v1241 = vpop.f32.mrb[0].mxu0
        %1242 = vmatprep.mubr.bf16.mxu0 %v1081
        %1243 = vmatmul.mubr.bf16.gmra.mrb[0].mxu0 %v1080
        %v1244 = vpop.f32.mrb[0].mxu0
        %v1245 = vadd.f32 0.0, %v1244
        %v1246 = vpop.f32.mrb[0].mxu0
        %v1247 = vpop.f32.mrb[0].mxu0
        %v1248 = vadd.f32 0.0, %v1247
        %v1249 = vpop.f32.mrb[0].mxu0
        %1250 = vdwg.mxu0
        %v1251 = vadd.f32 %v1000, %v1221
        %v1252 = vadd.f32 %v1001, %v1224
        %v1253 = vadd.f32 %v1002, %v1229
        %v1254 = vadd.f32 %v1003, %v1232
        %v1255 = vadd.f32 %v1004, %v1237
        %v1256 = vadd.f32 %v1005, %v1240
        %v1257 = vadd.f32 %v1006, %v1245
        %v1258 = vadd.f32 %v1007, %v1248
        %s1259 = scalar_lea.vmem %s237, 32 [#allocation2]
        %v1260 = vld [vmem:[%s1259] sm:$0xff]
        %v1261 = vld [vmem:[%s1259 + $0x8] sm:$0xff]
        %v1262 = vld [vmem:[%s1259 + $0x10] sm:$0xff]
        %v1263 = vld [vmem:[%s1259 + $0x18] sm:$0xff]
        %v1264 = vld [vmem:[%s1259 + $0x20] sm:$0xff]
        %v1265 = vld [vmem:[%s1259 + $0x28] sm:$0xff]
        %v1266 = vld [vmem:[%s1259 + $0x30] sm:$0xff]
        %v1267 = vld [vmem:[%s1259 + $0x38] sm:$0xff]
        %s1268 = scalar_lea.vmem [#allocation5], 512
        %v1269 = vld [vmem:[%s1268] sm:$0xf]
        %v1270 = vld [vmem:[%s1268 + $0x4] sm:$0xf]
        %v1271 = vld [vmem:[%s1268 + $0x8] sm:$0xf]
        %v1272 = vld [vmem:[%s1268 + $0xc] sm:$0xf]
        %v1273 = vld [vmem:[%s1268 + $0x10] sm:$0xf]
        %v1274 = vld [vmem:[%s1268 + $0x14] sm:$0xf]
        %v1275 = vld [vmem:[%s1268 + $0x18] sm:$0xf]
        %v1276 = vld [vmem:[%s1268 + $0x1c] sm:$0xf]
        %v1277 = vld [vmem:[%s1268 + $0x20] sm:$0xf]
        %v1278 = vld [vmem:[%s1268 + $0x24] sm:$0xf]
        %v1279 = vld [vmem:[%s1268 + $0x28] sm:$0xf]
        %v1280 = vld [vmem:[%s1268 + $0x2c] sm:$0xf]
        %v1281 = vld [vmem:[%s1268 + $0x30] sm:$0xf]
        %v1282 = vld [vmem:[%s1268 + $0x34] sm:$0xf]
        %v1283 = vld [vmem:[%s1268 + $0x38] sm:$0xf]
        %v1284 = vld [vmem:[%s1268 + $0x3c] sm:$0xf]
        %v1285 = vld [vmem:[%s1268 + $0x40] sm:$0xf]
        %v1286 = vld [vmem:[%s1268 + $0x44] sm:$0xf]
        %v1287 = vld [vmem:[%s1268 + $0x48] sm:$0xf]
        %v1288 = vld [vmem:[%s1268 + $0x4c] sm:$0xf]
        %v1289 = vld [vmem:[%s1268 + $0x50] sm:$0xf]
        %v1290 = vld [vmem:[%s1268 + $0x54] sm:$0xf]
        %v1291 = vld [vmem:[%s1268 + $0x58] sm:$0xf]
        %v1292 = vld [vmem:[%s1268 + $0x5c] sm:$0xf]
        %v1293 = vld [vmem:[%s1268 + $0x60] sm:$0xf]
        %v1294 = vld [vmem:[%s1268 + $0x64] sm:$0xf]
        %v1295 = vld [vmem:[%s1268 + $0x68] sm:$0xf]
        %v1296 = vld [vmem:[%s1268 + $0x6c] sm:$0xf]
        %v1297 = vld [vmem:[%s1268 + $0x70] sm:$0xf]
        %v1298 = vld [vmem:[%s1268 + $0x74] sm:$0xf]
        %v1299 = vld [vmem:[%s1268 + $0x78] sm:$0xf]
        %v1300 = vld [vmem:[%s1268 + $0x7c] sm:$0xf]
        %v1309 = vunpack.c.l.b16 %v1260
        %v1310 = vunpack.c.h.b16 %v1260
        %v1311 = vunpack.c.l.b16 %v1261
        %v1312 = vunpack.c.h.b16 %v1261
        %v1313 = vunpack.c.l.b16 %v1262
        %v1314 = vunpack.c.h.b16 %v1262
        %v1315 = vunpack.c.l.b16 %v1263
        %v1316 = vunpack.c.h.b16 %v1263
        %v1317 = vunpack.c.l.b16 %v1264
        %v1318 = vunpack.c.h.b16 %v1264
        %v1319 = vunpack.c.l.b16 %v1265
        %v1320 = vunpack.c.h.b16 %v1265
        %v1321 = vunpack.c.l.b16 %v1266
        %v1322 = vunpack.c.h.b16 %v1266
        %v1323 = vunpack.c.l.b16 %v1267
        %v1324 = vunpack.c.h.b16 %v1267
        %v1325 = vpack.c.b16 %v1311, %v1309
        %v1326 = vpack.c.b16 %v1312, %v1310
        %v1327 = vpack.c.b16 %v1315, %v1313
        %v1328 = vpack.c.b16 %v1316, %v1314
        %v1329 = vpack.c.b16 %v1319, %v1317
        %v1330 = vpack.c.b16 %v1320, %v1318
        %v1331 = vpack.c.b16 %v1323, %v1321
        %v1332 = vpack.c.b16 %v1324, %v1322
        %v1373 = vunpack.c.l.b16 %v1269
        %v1374 = vunpack.c.l.b16 %v1270
        %v1375 = vunpack.c.l.b16 %v1271
        %v1376 = vunpack.c.l.b16 %v1272
        %v1377 = vunpack.c.l.b16 %v1273
        %v1378 = vunpack.c.l.b16 %v1274
        %v1379 = vunpack.c.l.b16 %v1275
        %v1380 = vunpack.c.l.b16 %v1276
        %v1381 = vunpack.c.l.b16 %v1277
        %v1382 = vunpack.c.l.b16 %v1278
        %v1383 = vunpack.c.l.b16 %v1279
        %v1384 = vunpack.c.l.b16 %v1280
        %v1385 = vunpack.c.l.b16 %v1281
        %v1386 = vunpack.c.l.b16 %v1282
        %v1387 = vunpack.c.l.b16 %v1283
        %v1388 = vunpack.c.l.b16 %v1284
        %v1389 = vunpack.c.l.b16 %v1285
        %v1390 = vunpack.c.l.b16 %v1286
        %v1391 = vunpack.c.l.b16 %v1287
        %v1392 = vunpack.c.l.b16 %v1288
        %v1393 = vunpack.c.l.b16 %v1289
        %v1394 = vunpack.c.l.b16 %v1290
        %v1395 = vunpack.c.l.b16 %v1291
        %v1396 = vunpack.c.l.b16 %v1292
        %v1397 = vunpack.c.l.b16 %v1293
        %v1398 = vunpack.c.l.b16 %v1294
        %v1399 = vunpack.c.l.b16 %v1295
        %v1400 = vunpack.c.l.b16 %v1296
        %v1401 = vunpack.c.l.b16 %v1297
        %v1402 = vunpack.c.l.b16 %v1298
        %v1403 = vunpack.c.l.b16 %v1299
        %v1404 = vunpack.c.l.b16 %v1300
        %v1405 = vpack.c.b16 %v1374, %v1373
        %v1406 = vpack.c.b16 %v1376, %v1375
        %v1407 = vpack.c.b16 %v1378, %v1377
        %v1408 = vpack.c.b16 %v1380, %v1379
        %v1409 = vpack.c.b16 %v1382, %v1381
        %v1410 = vpack.c.b16 %v1384, %v1383
        %v1411 = vpack.c.b16 %v1386, %v1385
        %v1412 = vpack.c.b16 %v1388, %v1387
        %v1413 = vpack.c.b16 %v1390, %v1389
        %v1414 = vpack.c.b16 %v1392, %v1391
        %v1415 = vpack.c.b16 %v1394, %v1393
        %v1416 = vpack.c.b16 %v1396, %v1395
        %v1417 = vpack.c.b16 %v1398, %v1397
        %v1418 = vpack.c.b16 %v1400, %v1399
        %v1419 = vpack.c.b16 %v1402, %v1401
        %v1420 = vpack.c.b16 %v1404, %v1403
        %1437 = vmatprep.subr.bf16.mxu0 0
        %1438 = vmatpush1.bf16.msra.mxu0 %v1405
        %1439 = vmatprep.subr.bf16.mxu0 0
        %1440 = vmatpush1.bf16.msra.mxu0 %v1406
        %1441 = vmatprep.subr.bf16.mxu0 0
        %1442 = vmatpush1.bf16.msra.mxu0 %v1407
        %1443 = vmatprep.subr.bf16.mxu0 0
        %1444 = vmatpush1.bf16.msra.mxu0 %v1408
        %1445 = vmatprep.subr.bf16.mxu0 0
        %1446 = vmatpush1.bf16.msra.mxu0 %v1409
        %1447 = vmatprep.subr.bf16.mxu0 0
        %1448 = vmatpush1.bf16.msra.mxu0 %v1410
        %1449 = vmatprep.subr.bf16.mxu0 0
        %1450 = vmatpush1.bf16.msra.mxu0 %v1411
        %1451 = vmatprep.subr.bf16.mxu0 0
        %1452 = vmatpush1.bf16.msra.mxu0 %v1412
        %1453 = vmatprep.subr.bf16.mxu0 0
        %1454 = vmatpush1.bf16.msra.mxu0 %v1413
        %1455 = vmatprep.subr.bf16.mxu0 0
        %1456 = vmatpush1.bf16.msra.mxu0 %v1414
        %1457 = vmatprep.subr.bf16.mxu0 0
        %1458 = vmatpush1.bf16.msra.mxu0 %v1415
        %1459 = vmatprep.subr.bf16.mxu0 0
        %1460 = vmatpush1.bf16.msra.mxu0 %v1416
        %1461 = vmatprep.subr.bf16.mxu0 0
        %1462 = vmatpush1.bf16.msra.mxu0 %v1417
        %1463 = vmatprep.subr.bf16.mxu0 0
        %1464 = vmatpush1.bf16.msra.mxu0 %v1418
        %1465 = vmatprep.subr.bf16.mxu0 0
        %1466 = vmatpush1.bf16.msra.mxu0 %v1419
        %1467 = vmatprep.subr.bf16.mxu0 0
        %1468 = vmatpush1.bf16.msra.mxu0 %v1420
        %1469 = vmatprep.mubr.bf16.mxu0 %v1326
        %1470 = vmatmul.mubr.bf16.gmra.mrb[0].mxu0 %v1325
        %v1471 = vpop.f32.mrb[0].mxu0
        %v1472 = vadd.f32 0.0, %v1471
        %v1473 = vpop.f32.mrb[0].mxu0
        %v1474 = vpop.f32.mrb[0].mxu0
        %v1475 = vadd.f32 0.0, %v1474
        %v1476 = vpop.f32.mrb[0].mxu0
        %1477 = vmatprep.mubr.bf16.mxu0 %v1328
        %1478 = vmatmul.mubr.bf16.gmra.mrb[0].mxu0 %v1327
        %v1479 = vpop.f32.mrb[0].mxu0
        %v1480 = vadd.f32 0.0, %v1479
        %v1481 = vpop.f32.mrb[0].mxu0
        %v1482 = vpop.f32.mrb[0].mxu0
        %v1483 = vadd.f32 0.0, %v1482
        %v1484 = vpop.f32.mrb[0].mxu0
        %1485 = vmatprep.mubr.bf16.mxu0 %v1330
        %1486 = vmatmul.mubr.bf16.gmra.mrb[0].mxu0 %v1329
        %v1487 = vpop.f32.mrb[0].mxu0
        %v1488 = vadd.f32 0.0, %v1487
        %v1489 = vpop.f32.mrb[0].mxu0
        %v1490 = vpop.f32.mrb[0].mxu0
        %v1491 = vadd.f32 0.0, %v1490
        %v1492 = vpop.f32.mrb[0].mxu0
        %1493 = vmatprep.mubr.bf16.mxu0 %v1332
        %1494 = vmatmul.mubr.bf16.gmra.mrb[0].mxu0 %v1331
        %v1495 = vpop.f32.mrb[0].mxu0
        %v1496 = vadd.f32 0.0, %v1495
        %v1497 = vpop.f32.mrb[0].mxu0
        %v1498 = vpop.f32.mrb[0].mxu0
        %v1499 = vadd.f32 0.0, %v1498
        %v1500 = vpop.f32.mrb[0].mxu0
        %1501 = vdwg.mxu0
        %v1502 = vadd.f32 %v1251, %v1472
        %v1503 = vadd.f32 %v1252, %v1475
        %v1504 = vadd.f32 %v1253, %v1480
        %v1505 = vadd.f32 %v1254, %v1483
        %v1506 = vadd.f32 %v1255, %v1488
        %v1507 = vadd.f32 %v1256, %v1491
        %v1508 = vadd.f32 %v1257, %v1496
        %v1509 = vadd.f32 %v1258, %v1499
        %v1510 = vld [vmem:[%s2] sm:$0x1]
        %v1512 = vlaneseq
        %v1513 = vshrl.u32 %v1512, 7
        %v1514 = vsub.s32 0, %v1513
        %v1515 = vrot.slane %v1510, %v1514
        %v1517 = vadd.f32 %v1502, %v1515
        %v1518 = vadd.f32 %v1503, %v1515
        %v1519 = vadd.f32 %v1504, %v1515
        %v1520 = vadd.f32 %v1505, %v1515
        %v1521 = vadd.f32 %v1506, %v1515
        %v1522 = vadd.f32 %v1507, %v1515
        %v1523 = vadd.f32 %v1508, %v1515
        %v1524 = vadd.f32 %v1509, %v1515
        %v1525 = vmax.f32 %v1517, 0.0
        %v1526 = vmax.f32 %v1518, 0.0
        %v1527 = vmax.f32 %v1519, 0.0
        %v1528 = vmax.f32 %v1520, 0.0
        %v1529 = vmax.f32 %v1521, 0.0
        %v1530 = vmax.f32 %v1522, 0.0
        %v1531 = vmax.f32 %v1523, 0.0
        %v1532 = vmax.f32 %v1524, 0.0
        %v1533 = vmax.f32 %v1525, %v1529
        %v1534 = vmax.f32 %v1526, %v1530
        %v1535 = vmax.f32 %v1527, %v1531
        %v1536 = vmax.f32 %v1528, %v1532
        %v1537 = vmax.f32 %v1533, %v1534
        %v1538 = vmax.f32 %v1535, %v1536
        %v1539 = vmax.f32 %v1537, %v1538
        %v1540 = vld [vmem:[#allocation7] sm:$0xff]
        %v1541 = vld [vmem:[#allocation7 + $0x8] sm:$0xff]
        %v1542 = vld [vmem:[#allocation7 + $0x10] sm:$0xff]
        %v1543 = vld [vmem:[#allocation7 + $0x18] sm:$0xff]
        %v1544 = vld [vmem:[#allocation7 + $0x20] sm:$0xff]
        %v1545 = vld [vmem:[#allocation7 + $0x28] sm:$0xff]
        %v1546 = vld [vmem:[#allocation7 + $0x30] sm:$0xff]
        %v1547 = vld [vmem:[#allocation7 + $0x38] sm:$0xff]
        %v1548 = vld [vmem:[#allocation7 + $0x40] sm:$0xff]
        %v1549 = vld [vmem:[#allocation7 + $0x48] sm:$0xff]
        %v1550 = vld [vmem:[#allocation7 + $0x50] sm:$0xff]
        %v1551 = vld [vmem:[#allocation7 + $0x58] sm:$0xff]
        %v1552 = vld [vmem:[#allocation7 + $0x60] sm:$0xff]
        %v1553 = vld [vmem:[#allocation7 + $0x68] sm:$0xff]
        %v1554 = vld [vmem:[#allocation7 + $0x70] sm:$0xff]
        %v1555 = vld [vmem:[#allocation7 + $0x78] sm:$0xff]
        %v1556 = vld [vmem:[%s4] sm:$0x1]
        %v1558 = vlaneseq
        %v1559 = vshrl.u32 %v1558, 7
        %v1560 = vsub.s32 0, %v1559
        %v1561 = vrot.slane %v1556, %v1560
        %1563 = vmatprep.subr.mxu0 0.0
        %1564 = vmatpush1.msra.mxu0 %v1540
        %1565 = vmatprep.subr.mxu0 0.0
        %1566 = vmatpush1.msra.mxu0 %v1541
        %1567 = vmatprep.subr.mxu0 0.0
        %1568 = vmatpush1.msra.mxu0 %v1542
        %1569 = vmatprep.subr.mxu0 0.0
        %1570 = vmatpush1.msra.mxu0 %v1543
        %1571 = vmatprep.subr.mxu0 0.0
        %1572 = vmatpush1.msra.mxu0 %v1544
        %1573 = vmatprep.subr.mxu0 0.0
        %1574 = vmatpush1.msra.mxu0 %v1545
        %1575 = vmatprep.subr.mxu0 0.0
        %1576 = vmatpush1.msra.mxu0 %v1546
        %1577 = vmatprep.subr.mxu0 0.0
        %1578 = vmatpush1.msra.mxu0 %v1547
        %1579 = vmatprep.subr.mxu0 0.0
        %1580 = vmatpush1.msra.mxu0 %v1548
        %1581 = vmatprep.subr.mxu0 0.0
        %1582 = vmatpush1.msra.mxu0 %v1549
        %1583 = vmatprep.subr.mxu0 0.0
        %1584 = vmatpush1.msra.mxu0 %v1550
        %1585 = vmatprep.subr.mxu0 0.0
        %1586 = vmatpush1.msra.mxu0 %v1551
        %1587 = vmatprep.subr.mxu0 0.0
        %1588 = vmatpush1.msra.mxu0 %v1552
        %1589 = vmatprep.subr.mxu0 0.0
        %1590 = vmatpush1.msra.mxu0 %v1553
        %1591 = vmatprep.subr.mxu0 0.0
        %1592 = vmatpush1.msra.mxu0 %v1554
        %1593 = vmatprep.subr.mxu0 0.0
        %1594 = vmatpush1.msra.mxu0 %v1555
        %1595 = vmatprep.subr.mxu0 0.0
        %1596 = vmatpush1.msra.mxu0 0.0
        %1597 = vmatprep.subr.mxu0 0.0
        %1598 = vmatpush1.msra.mxu0 0.0
        %1599 = vmatprep.subr.mxu0 0.0
        %1600 = vmatpush1.msra.mxu0 0.0
        %1601 = vmatprep.subr.mxu0 0.0
        %1602 = vmatpush1.msra.mxu0 0.0
        %1603 = vmatprep.subr.mxu0 0.0
        %1604 = vmatpush1.msra.mxu0 0.0
        %1605 = vmatprep.subr.mxu0 0.0
        %1606 = vmatpush1.msra.mxu0 0.0
        %1607 = vmatprep.subr.mxu0 0.0
        %1608 = vmatpush1.msra.mxu0 0.0
        %1609 = vmatprep.subr.mxu0 0.0
        %1610 = vmatpush1.msra.mxu0 0.0
        %1611 = vmatprep.subr.mxu0 0.0
        %1612 = vmatpush1.msra.mxu0 0.0
        %1613 = vmatprep.subr.mxu0 0.0
        %1614 = vmatpush1.msra.mxu0 0.0
        %1615 = vmatprep.subr.mxu0 0.0
        %1616 = vmatpush1.msra.mxu0 0.0
        %1617 = vmatprep.subr.mxu0 0.0
        %1618 = vmatpush1.msra.mxu0 0.0
        %1619 = vmatprep.subr.mxu0 0.0
        %1620 = vmatpush1.msra.mxu0 0.0
        %1621 = vmatprep.subr.mxu0 0.0
        %1622 = vmatpush1.msra.mxu0 0.0
        %1623 = vmatprep.subr.mxu0 0.0
        %1624 = vmatpush1.msra.mxu0 0.0
        %1625 = vmatprep.subr.mxu0 0.0
        %1626 = vmatpush1.msra.mxu0 0.0
        %1627 = vmatprep.mubr.f32.mxu0 0.0
        %1628 = vmatmul.mubr.f32.gmra.mrb[0].mxu0 %v1539
        %v1629 = vpop.f32.mrb[0].mxu0
        %v1630 = vadd.f32 %v1561, %v1629
        %v1631 = vpop.f32.mrb[0].mxu0
        %1632 = vdwg.mxu0
        %1633 = vst [vmem:[%s271] sm:$0xff] %v1630
        %s1634 = sand.u32 %s141, 1
        %s1635 = scalar_lea.sflag [#allocation4], %s1634
        %s1636 = sand.u32 %s141, 1
        %s1637 = smul.addr %s1636, 8
        %s1638 = scalar_lea.vmem [#allocation8], %s1637
        // Predicated region
        $region53: #{tpu_custom_call.1} parent=39 // pred_check
          %p1639 = pneg %p151
        $region54: #{tpu_custom_call.1} parent=39 // pred_check_branch
          %1641 = sbr.rel (%p1639) target = $region56
        $region55: #{tpu_custom_call.1} parent=39 // pred_region
          %s1643 = ssub.s32 128, 128
          %1644 = vsyncadd %s1635, %s1643
          %s1645 = smul.addr %s23, 128
          %s1646 = scalar_lea.hbm %s5, %s1645
          %s1648 = sshll.u32 %s1638, 4
          %s1649 = int_to_ptr.vmem [resolvable:$true] %s1648
          %1651 = dma.vmem_to_hbm [thread:$0]  %s1649, 128, %s1646, %s1635
        $region56: #{tpu_custom_call.1} parent=39 // pred_fallthru
          _
      $region40: #{tpu_custom_call.1} parent=5 // pred_fallthru
        _
      %p1652 = scmp.le.s32.totalorder 2, %s18
      // Predicated region
      $region57: #{tpu_custom_call.1} parent=5 // pred_check
        %p1653 = pneg %p1652
      $region58: #{tpu_custom_call.1} parent=5 // pred_check_branch
        %1655 = sbr.rel (%p1653) target = $region60
      $region59: #{tpu_custom_call.1} parent=5 // pred_region
        %s1656 = ssub.s32 %s18, 2
        // Predicated region
        $region61: #{tpu_custom_call.1} parent=59 // pred_check
          %p1657 = pneg %p157
        $region62: #{tpu_custom_call.1} parent=59 // pred_check_branch
          %1659 = sbr.rel (%p1657) target = $region64
        $region63: #{tpu_custom_call.1} parent=59 // pred_region
          %s1660 = sand.u32 %s142, 1
          %s1661 = scalar_lea.sflag [#allocation4], %s1660
          %s1662 = sand.u32 %s142, 1
          %s1663 = smul.addr %s1662, 8
          %s1664 = scalar_lea.vmem [#allocation8], %s1663
          %1665 = dma.done %s1661, 128
        $region64: #{tpu_custom_call.1} parent=59 // pred_fallthru
          _
      $region60: #{tpu_custom_call.1} parent=5 // pred_fallthru
        _
    $region6: #{tpu_custom_call.1} parent=1 // loop_footer
      %s22 = sadd.s32 1, %s18
    $region7: #{tpu_custom_call.1} parent=1 // loop_footer_branch
      %17 = sbr.rel target = $region3
    $region8: #{tpu_custom_call.1} parent=1 // loop_exit
      _
    %1666 = vsyncpa [#allocation3], 1
    %s1667 = scalar_lea.sflag [#allocation3], 1
    %1668 = vsyncpa %s1667, 1
    %1669 = vsyncpa [#allocation6], 1
    %1670 = vsyncpa [#allocation4], 1
    %s1671 = scalar_lea.sflag [#allocation4], 1
    %1672 = vsyncpa %s1671, 1

</llo_original>
